<compile_context>
chip_gen: v6e
topology: v6e:2x2x1
jax: 0.10.0
libtpu: 0.0.40
codegen_flags: <defaults>
</compile_context>

<pallas_src>
import math
import functools

import jax
import jax.numpy as jnp
from jax.experimental import pallas as pl
from jax.experimental.pallas import tpu as pltpu


def _round_up(x, m):
    return ((x + m - 1) // m) * m


def _device_kind():
    try:
        return jax.devices()[0].device_kind.lower()
    except Exception:
        return ""


# ----------------------------------------------------------------------------
# Kernel
# ----------------------------------------------------------------------------
def kan_linear_kernel(x_ref, grid_ref, inv_ref, w_ref, out_ref, xaug_ref, *,
                      grid_size, spline_order, in_features):
    """One (TM rows) x (TN out-cols) tile of the KANLinear forward.

    x_ref    : (TM, in)      input rows (f32 on v5e, bf16 on v6e/v7x)
    grid_ref : (n_knots, in)              f32 knot grid (knot-major)
    inv_ref  : (spline_order*n_knots, in) f32 reciprocals of knot differences;
                                          row (k-1)*n_knots + j = 1/(g[j+k]-g[j])
    w_ref    : ((G+K+1)*in, TN)           bf16 fused [base | spline] weight
    out_ref  : (TM, TN)                   f32 output tile
    xaug_ref : (TM, (G+K+1)*in)           bf16 scratch; X_aug cached per row
                                          tile and reused across column tiles
    """
    n_knots = grid_size + 2 * spline_order + 1

    # Build the augmented activation only on the first column tile of each
    # row tile; subsequent column tiles are pure matmul (scratch is carried
    # across the "arbitrary" column axis).
    @pl.when(pl.program_id(1) == 0)
    def _build_xaug():
        x = x_ref[...]
        dt = x.dtype

        # SiLU: exp on the EUP; the exact divide is replaced by the
        # (otherwise idle) EUP approximate reciprocal.
        xf = x.astype(jnp.float32)
        silu = xf * pl.reciprocal(1.0 + jnp.exp(-xf), approx=True)
        xaug_ref[:, 0:in_features] = silu.astype(xaug_ref.dtype)

        # Hoist every knot row once (JAX does not CSE broadcast_in_dim).
        g = [grid_ref[j:j + 1, :].astype(dt) for j in range(n_knots)]

        def inv(k, j):  # 1 / (g[j+k] - g[j]); precomputed in the wrapper
            r = (k - 1) * n_knots + j
            return inv_ref[r:r + 1, :].astype(dt)

        # Order-0 indicator bases with rolling compares: only two compare
        # results are live at any time (instead of all n_knots).
        ge_prev = (x >= g[0]).astype(dt)
        bases = []
        for j in range(n_knots - 1):
            ge_next = (x >= g[j + 1]).astype(dt)
            bases.append(ge_prev * (1.0 - ge_next))
            ge_prev = ge_next

        # Cox-de Boor recursion; divides replaced by precomputed reciprocals.
        # Final-order bases are stored straight into their bf16 X_aug slice,
        # freeing each intermediate immediately (no concat, no second slab).
        for k in range(1, spline_order + 1):
            last = k == spline_order
            new_bases = []
            for j in range(n_knots - 1 - k):
                b = ((x - g[j]) * inv(k, j) * bases[j]
                     + (g[j + k + 1] - x) * inv(k, j + 1) * bases[j + 1])
                if last:
                    lo = (j + 1) * in_features
                    xaug_ref[:, lo:lo + in_features] = b.astype(xaug_ref.dtype)
                else:
                    new_bases.append(b)
            bases = new_bases

    # Single fused wide-K MXU matmul against the cached X_aug scratch.
    out_ref[...] = jnp.dot(xaug_ref[...], w_ref[...],
                           preferred_element_type=jnp.float32
                           ).astype(out_ref.dtype)


# ----------------------------------------------------------------------------
# Parameter construction & one-time layout prep
# ----------------------------------------------------------------------------
def make_kan_params(key, in_features, out_features, *, grid_size=5,
                    spline_order=3, grid_range=(-1.0, 1.0)):
    """Parameter shapes match the PyTorch module."""
    h = (grid_range[1] - grid_range[0]) / grid_size
    knots = (jnp.arange(-spline_order, grid_size + spline_order + 1,
                        dtype=jnp.float32) * h + grid_range[0])
    grid = jnp.broadcast_to(knots, (in_features, knots.shape[0]))  # (in, n_knots)

    k1, k2, k3 = jax.random.split(key, 3)
    bound = 1.0 / math.sqrt(in_features)      # kaiming_uniform with a=sqrt(5)
    base_weight = jax.random.uniform(k1, (out_features, in_features),
                                     jnp.float32, -bound, bound)
    # TODO(synk): PyTorch initialises spline_weight via a least-squares fit of
    # random noise (curve2coeff / torch.linalg.lstsq); plain uniform noise is
    # used here (forward semantics do not depend on the init scheme).
    spline_weight = jax.random.uniform(
        k2, (out_features, in_features, grid_size + spline_order),
        jnp.float32, -0.5, 0.5)
    spline_scaler = jax.random.uniform(k3, (out_features, in_features),
                                       jnp.float32, -bound, bound)
    return dict(grid=grid, base_weight=base_weight,
                spline_weight=spline_weight, spline_scaler=spline_scaler)


def prepare_kan_params(params, *, grid_size=5, spline_order=3,
                       matmul_dtype=jnp.bfloat16, tile_out=512):
    """One-time prep (hoisted out of the per-call path): layouts, fused weight,
    knot-difference reciprocals, lane-/MXU-dense output padding."""
    out_features, in_features = params["base_weight"].shape
    n_knots = grid_size + 2 * spline_order + 1
    n_coeff = grid_size + spline_order

    grid_t = jnp.transpose(params["grid"]).astype(jnp.float32)      # (n_knots, in)

    # Reciprocals of the Cox-de Boor denominators (depend only on the grid).
    inv = jnp.zeros((spline_order, n_knots, in_features), jnp.float32)
    for k in range(1, spline_order + 1):
        inv = inv.at[k - 1, :n_knots - k, :].set(1.0 / (grid_t[k:] - grid_t[:-k]))
    inv_flat = inv.reshape(spline_order * n_knots, in_features)

    # Fused weight: rows ordered [ base(in) | coeff0(in) | coeff1(in) | ... ],
    # matching X_aug = [silu | bases_0 | ... | bases_{G+K-1}].
    scaled_sw = params["spline_weight"] * params["spline_scaler"][:, :, None]
    spline_w = jnp.transpose(scaled_sw, (2, 1, 0)).reshape(
        n_coeff * in_features, out_features)
    base_w = jnp.transpose(params["base_weight"])                   # (in, out)
    w_aug = jnp.concatenate([base_w, spline_w], axis=0)             # ((G+K+1)*in, out)

    # Column-tile selection: keep the tile lane-/MXU-dense.  Prefer a tile
    # width that divides the lane-padded output; otherwise pad the columns up
    # to a multiple of the tile rather than shrinking the tile to 128.
    out_lane = _round_up(out_features, 128)
    tn = min(_round_up(tile_out, 128), out_lane)
    while out_lane % tn != 0 and tn > 256:
        tn -= 128
    out_pad = _round_up(out_lane, tn)

    w_aug = jnp.pad(w_aug, ((0, 0), (0, out_pad - out_features)))

    # TODO(synk): on v7x, optionally quantize W_aug to fp8 with per-column
    # scales folded into an f32 epilogue (not portable to v5e/v6e).
    return dict(grid_t=grid_t, inv=inv_flat,
                w_aug=w_aug.astype(matmul_dtype),
                in_features=in_features, out_features=out_features,
                out_pad=out_pad, tile_out=tn,
                grid_size=grid_size, spline_order=spline_order)


# ----------------------------------------------------------------------------
# Forward wrapper
# ----------------------------------------------------------------------------
def kan_linear_forward(prepped, x, *, tile_rows=None):
    in_features = prepped["in_features"]
    out_features = prepped["out_features"]
    out_pad = prepped["out_pad"]
    tn = prepped["tile_out"]
    grid_size = prepped["grid_size"]
    spline_order = prepped["spline_order"]
    n_knots = grid_size + 2 * spline_order + 1
    k_aug = (grid_size + spline_order + 1) * in_features

    kind = _device_kind()
    is_v7x = "v7" in kind
    # bf16 VALU exists on v6e/v7x -> run the basis recursion (and the x DMA)
    # in bf16 there; v5e (no bf16 VPU) keeps f32.
    basis_dtype = jnp.bfloat16 if ("v6" in kind or "v7" in kind) else jnp.float32

    assert x.shape[-1] == in_features
    orig_shape = x.shape
    x2d = x.reshape(-1, in_features).astype(basis_dtype)
    n = x2d.shape[0]

    # Row tile: multiple of 16 (bf16 sublane packing).  Larger tiles on the
    # 128-MiB-VMEM chips (v5e/v6e) amortise W_aug streaming; smaller on v7x
    # (64 MiB per TensorCore).
    if tile_rows is None:
        tile_rows = 256 if is_v7x else 512
    tm = min(tile_rows, _round_up(n, 16))
    n_pad = _round_up(n, tm)
    if n_pad != n:
        x2d = jnp.pad(x2d, ((0, n_pad - n), (0, 0)))

    grid = (n_pad // tm, out_pad // tn)

    # Rough VMEM budget: double-buffered x / W / out tiles, resident grid &
    # reciprocals, the cached X_aug scratch, and live recursion intermediates.
    bsz = jnp.dtype(basis_dtype).itemsize
    wsz = jnp.dtype(prepped["w_aug"].dtype).itemsize
    est = (2 * tm * in_features * bsz
           + 2 * k_aug * tn * wsz
           + 2 * tm * tn * 4
           + 2 * (spline_order + 1) * n_knots * in_features * 4
           + tm * k_aug * 2
           + (n_knots + 6) * tm * in_features * bsz
           + 2 * tm * in_features * 4)
    cap = (56 if is_v7x else 100) * 1024 * 1024   # stay well below physical VMEM
    vmem_limit = int(min(max(int(est * 1.5), 32 * 1024 * 1024), cap))

    # TODO(synk): for in_features >= ~2048 (v7x) / ~4096 (v5e/v6e) add a third
    # "arbitrary" K-reduction grid axis over k_aug with an f32 accumulator
    # scratch instead of keeping the full fused weight block resident.
    # TODO(synk): for in_features < 128, fold row groups into the lane axis
    # for the basis stage (only in/128 of the lanes are active there).
    kernel = functools.partial(kan_linear_kernel, grid_size=grid_size,
                               spline_order=spline_order,
                               in_features=in_features)
    out = pl.pallas_call(
        kernel,
        out_shape=jax.ShapeDtypeStruct((n_pad, out_pad), jnp.float32),
        grid=grid,
        in_specs=[
            pl.BlockSpec((tm, in_features), lambda i, j: (i, 0)),
            pl.BlockSpec((n_knots, in_features), lambda i, j: (0, 0)),
            pl.BlockSpec((spline_order * n_knots, in_features),
                         lambda i, j: (0, 0)),
            pl.BlockSpec((k_aug, tn), lambda i, j: (0, j)),
        ],
        out_specs=pl.BlockSpec((tm, tn), lambda i, j: (i, j)),
        scratch_shapes=[pltpu.VMEM((tm, k_aug), jnp.bfloat16)],
        compiler_params=pltpu.CompilerParams(
            # Row axis parallel (megacore sharding on v7x); column axis must
            # be "arbitrary" so the X_aug scratch carries across column tiles.
            dimension_semantics=("parallel", "arbitrary"),
            vmem_limit_bytes=vmem_limit),
    )(x2d, prepped["grid_t"], prepped["inv"], prepped["w_aug"])

    out = out[:n, :out_features]
    return out.reshape(*orig_shape[:-1], out_features)


# ----------------------------------------------------------------------------
# Pure-JAX reference (mirrors the PyTorch forward exactly, f32 everywhere)
# ----------------------------------------------------------------------------
def kan_linear_reference(params, x, *, grid_size=5, spline_order=3):
    out_features, in_features = params["base_weight"].shape
    orig_shape = x.shape
    x2 = x.reshape(-1, in_features).astype(jnp.float32)
    grid = params["grid"]                                       # (in, n_knots)
    xe = x2[:, :, None]
    bases = jnp.logical_and(xe >= grid[None, :, :-1],
                            xe < grid[None, :, 1:]).astype(x2.dtype)
    for k in range(1, spline_order + 1):
        bases = ((xe - grid[None, :, :-(k + 1)])
                 / (grid[None, :, k:-1] - grid[None, :, :-(k + 1)]) * bases[:, :, :-1]
                 + (grid[None, :, k + 1:] - xe)
                 / (grid[None, :, k + 1:] - grid[None, :, 1:-k]) * bases[:, :, 1:])
    base_out = jax.nn.silu(x2) @ params["base_weight"].T
    scaled = params["spline_weight"] * params["spline_scaler"][:, :, None]
    spline_out = bases.reshape(x2.shape[0], -1) @ scaled.reshape(out_features, -1).T
    return (base_out + spline_out).reshape(*orig_shape[:-1], out_features)


if __name__ == "__main__":
    in_features, out_features = 32, 32
    key = jax.random.PRNGKey(0)
    kp, kx = jax.random.split(key)

    params = make_kan_params(kp, in_features, out_features)
    prepped = prepare_kan_params(params)

    # x in the grid range [-1, 1); leading dims (2, 8) flatten to N=16 rows.
    x = jax.random.uniform(kx, (2, 8, in_features), jnp.float32, -1.0, 1.0)

    out = jax.block_until_ready(kan_linear_forward(prepped, x))
    ref = kan_linear_reference(params, x)

    assert out.shape == (2, 8, out_features), out.shape
    err = float(jnp.max(jnp.abs(out - ref)))
    # bf16 MXU operands everywhere; on v6e/v7x the basis recursion also runs
    # in bf16, so the tolerance is re-derived (looser) for those chips.
    kind = _device_kind()
    rel = 8e-2 if ("v6" in kind or "v7" in kind) else 3e-2
    tol = rel + rel * float(jnp.max(jnp.abs(ref)))
    assert err <= tol, (err, tol)
    print("KERNEL_OK")
</pallas_src>

<mosaic_0001>
module attributes {stable_mosaic.version = 11 : i64} {
  func.func @kan_linear_kernel(%arg0: i32, %arg1: i32, %arg2: memref<16x32xf32, #tpu.memory_space<vmem>>, %arg3: memref<12x32xf32, #tpu.memory_space<vmem>>, %arg4: memref<36x32xf32, #tpu.memory_space<vmem>>, %arg5: memref<288x128xbf16, #tpu.memory_space<vmem>>, %arg6: memref<16x128xf32, #tpu.memory_space<vmem>>, %arg7: memref<16x288xbf16, #tpu.memory_space<vmem>>) attributes {dimension_semantics = [#tpu.dimension_semantics<parallel>, #tpu.dimension_semantics<arbitrary>], iteration_bounds = array<i64: 1, 1>, scalar_prefetch = 0 : i64, scratch_operands = 1 : i64, tpu.core_type = #tpu.core_type<tc>, window_params = [{transform_indices = @transform_0, window_bounds = array<i64: 16, 32>}, {pipeline_mode = #tpu.pipeline_mode<synchronous>, transform_indices = @transform_1, window_bounds = array<i64: 12, 32>}, {pipeline_mode = #tpu.pipeline_mode<synchronous>, transform_indices = @transform_2, window_bounds = array<i64: 36, 32>}, {transform_indices = @transform_3, window_bounds = array<i64: 288, 128>}, {transform_indices = @transform_4, window_bounds = array<i64: 16, 128>}]} {
    %c0_i32 = arith.constant 0 : i32
    %0 = arith.cmpi eq, %arg1, %c0_i32 : i32
    %1 = arith.extui %0 : i1 to i32
    %c0_i32_0 = arith.constant 0 : i32
    %2 = arith.cmpi ne, %1, %c0_i32_0 : i32
    scf.if %2 {
      %c0_6 = arith.constant 0 : index
      %c0_7 = arith.constant 0 : index
      %7 = vector.load %arg2[%c0_6, %c0_7] : memref<16x32xf32, #tpu.memory_space<vmem>>, vector<16x32xf32>
      %cst_8 = arith.constant 0.000000e+00 : f32
      %8 = vector.broadcast %cst_8 : f32 to vector<16x32xf32>
      %9 = arith.subf %8, %7 : vector<16x32xf32>
      %10 = math.exp %9 : vector<16x32xf32>
      %cst_9 = arith.constant 1.000000e+00 : f32
      %11 = vector.broadcast %cst_9 : f32 to vector<16x32xf32>
      %12 = arith.addf %11, %10 : vector<16x32xf32>
      %13 = tpu.reciprocal %12 {approx = true} : vector<16x32xf32> -> vector<16x32xf32>
      %14 = arith.mulf %7, %13 : vector<16x32xf32>
      %15 = arith.truncf %14 : vector<16x32xf32> to vector<16x32xbf16>
      %c0_10 = arith.constant 0 : index
      %c0_11 = arith.constant 0 : index
      %16 = vector.load %arg7[%c0_10, %c0_11] : memref<16x288xbf16, #tpu.memory_space<vmem>>, vector<16x32xbf16>
      tpu.vector_store %arg7[%c0_10, %c0_11], %15 {strides = array<i32>} : memref<16x288xbf16, #tpu.memory_space<vmem>>, vector<16x32xbf16>,
      %c0_12 = arith.constant 0 : index
      %c0_13 = arith.constant 0 : index
      %17 = vector.load %arg3[%c0_12, %c0_13] : memref<12x32xf32, #tpu.memory_space<vmem>>, vector<1x32xf32>
      %c1 = arith.constant 1 : index
      %c0_14 = arith.constant 0 : index
      %18 = vector.load %arg3[%c1, %c0_14] : memref<12x32xf32, #tpu.memory_space<vmem>>, vector<1x32xf32>
      %c2 = arith.constant 2 : index
      %c0_15 = arith.constant 0 : index
      %19 = vector.load %arg3[%c2, %c0_15] : memref<12x32xf32, #tpu.memory_space<vmem>>, vector<1x32xf32>
      %c3 = arith.constant 3 : index
      %c0_16 = arith.constant 0 : index
      %20 = vector.load %arg3[%c3, %c0_16] : memref<12x32xf32, #tpu.memory_space<vmem>>, vector<1x32xf32>
      %c4 = arith.constant 4 : index
      %c0_17 = arith.constant 0 : index
      %21 = vector.load %arg3[%c4, %c0_17] : memref<12x32xf32, #tpu.memory_space<vmem>>, vector<1x32xf32>
      %c5 = arith.constant 5 : index
      %c0_18 = arith.constant 0 : index
      %22 = vector.load %arg3[%c5, %c0_18] : memref<12x32xf32, #tpu.memory_space<vmem>>, vector<1x32xf32>
      %c6 = arith.constant 6 : index
      %c0_19 = arith.constant 0 : index
      %23 = vector.load %arg3[%c6, %c0_19] : memref<12x32xf32, #tpu.memory_space<vmem>>, vector<1x32xf32>
      %c7 = arith.constant 7 : index
      %c0_20 = arith.constant 0 : index
      %24 = vector.load %arg3[%c7, %c0_20] : memref<12x32xf32, #tpu.memory_space<vmem>>, vector<1x32xf32>
      %c8 = arith.constant 8 : index
      %c0_21 = arith.constant 0 : index
      %25 = vector.load %arg3[%c8, %c0_21] : memref<12x32xf32, #tpu.memory_space<vmem>>, vector<1x32xf32>
      %c9 = arith.constant 9 : index
      %c0_22 = arith.constant 0 : index
      %26 = vector.load %arg3[%c9, %c0_22] : memref<12x32xf32, #tpu.memory_space<vmem>>, vector<1x32xf32>
      %c10 = arith.constant 10 : index
      %c0_23 = arith.constant 0 : index
      %27 = vector.load %arg3[%c10, %c0_23] : memref<12x32xf32, #tpu.memory_space<vmem>>, vector<1x32xf32>
      %c11 = arith.constant 11 : index
      %c0_24 = arith.constant 0 : index
      %28 = vector.load %arg3[%c11, %c0_24] : memref<12x32xf32, #tpu.memory_space<vmem>>, vector<1x32xf32>
      %29 = vector.broadcast %17 : vector<1x32xf32> to vector<16x32xf32>
      %30 = arith.cmpf oge, %7, %29 : vector<16x32xf32>
      %31 = arith.extui %30 : vector<16x32xi1> to vector<16x32xi32>
      %32 = arith.sitofp %31 : vector<16x32xi32> to vector<16x32xf32>
      %33 = vector.broadcast %18 : vector<1x32xf32> to vector<16x32xf32>
      %34 = arith.cmpf oge, %7, %33 : vector<16x32xf32>
      %35 = arith.extui %34 : vector<16x32xi1> to vector<16x32xi32>
      %36 = arith.sitofp %35 : vector<16x32xi32> to vector<16x32xf32>
      %cst_25 = arith.constant 1.000000e+00 : f32
      %37 = vector.broadcast %cst_25 : f32 to vector<16x32xf32>
      %38 = arith.subf %37, %36 : vector<16x32xf32>
      %39 = arith.mulf %32, %38 : vector<16x32xf32>
      %40 = vector.broadcast %19 : vector<1x32xf32> to vector<16x32xf32>
      %41 = arith.cmpf oge, %7, %40 : vector<16x32xf32>
      %42 = arith.extui %41 : vector<16x32xi1> to vector<16x32xi32>
      %43 = arith.sitofp %42 : vector<16x32xi32> to vector<16x32xf32>
      %cst_26 = arith.constant 1.000000e+00 : f32
      %44 = vector.broadcast %cst_26 : f32 to vector<16x32xf32>
      %45 = arith.subf %44, %43 : vector<16x32xf32>
      %46 = arith.mulf %36, %45 : vector<16x32xf32>
      %47 = vector.broadcast %20 : vector<1x32xf32> to vector<16x32xf32>
      %48 = arith.cmpf oge, %7, %47 : vector<16x32xf32>
      %49 = arith.extui %48 : vector<16x32xi1> to vector<16x32xi32>
      %50 = arith.sitofp %49 : vector<16x32xi32> to vector<16x32xf32>
      %cst_27 = arith.constant 1.000000e+00 : f32
      %51 = vector.broadcast %cst_27 : f32 to vector<16x32xf32>
      %52 = arith.subf %51, %50 : vector<16x32xf32>
      %53 = arith.mulf %43, %52 : vector<16x32xf32>
      %54 = vector.broadcast %21 : vector<1x32xf32> to vector<16x32xf32>
      %55 = arith.cmpf oge, %7, %54 : vector<16x32xf32>
      %56 = arith.extui %55 : vector<16x32xi1> to vector<16x32xi32>
      %57 = arith.sitofp %56 : vector<16x32xi32> to vector<16x32xf32>
      %cst_28 = arith.constant 1.000000e+00 : f32
      %58 = vector.broadcast %cst_28 : f32 to vector<16x32xf32>
      %59 = arith.subf %58, %57 : vector<16x32xf32>
      %60 = arith.mulf %50, %59 : vector<16x32xf32>
      %61 = vector.broadcast %22 : vector<1x32xf32> to vector<16x32xf32>
      %62 = arith.cmpf oge, %7, %61 : vector<16x32xf32>
      %63 = arith.extui %62 : vector<16x32xi1> to vector<16x32xi32>
      %64 = arith.sitofp %63 : vector<16x32xi32> to vector<16x32xf32>
      %cst_29 = arith.constant 1.000000e+00 : f32
      %65 = vector.broadcast %cst_29 : f32 to vector<16x32xf32>
      %66 = arith.subf %65, %64 : vector<16x32xf32>
      %67 = arith.mulf %57, %66 : vector<16x32xf32>
      %68 = vector.broadcast %23 : vector<1x32xf32> to vector<16x32xf32>
      %69 = arith.cmpf oge, %7, %68 : vector<16x32xf32>
      %70 = arith.extui %69 : vector<16x32xi1> to vector<16x32xi32>
      %71 = arith.sitofp %70 : vector<16x32xi32> to vector<16x32xf32>
      %cst_30 = arith.constant 1.000000e+00 : f32
      %72 = vector.broadcast %cst_30 : f32 to vector<16x32xf32>
      %73 = arith.subf %72, %71 : vector<16x32xf32>
      %74 = arith.mulf %64, %73 : vector<16x32xf32>
      %75 = vector.broadcast %24 : vector<1x32xf32> to vector<16x32xf32>
      %76 = arith.cmpf oge, %7, %75 : vector<16x32xf32>
      %77 = arith.extui %76 : vector<16x32xi1> to vector<16x32xi32>
      %78 = arith.sitofp %77 : vector<16x32xi32> to vector<16x32xf32>
      %cst_31 = arith.constant 1.000000e+00 : f32
      %79 = vector.broadcast %cst_31 : f32 to vector<16x32xf32>
      %80 = arith.subf %79, %78 : vector<16x32xf32>
      %81 = arith.mulf %71, %80 : vector<16x32xf32>
      %82 = vector.broadcast %25 : vector<1x32xf32> to vector<16x32xf32>
      %83 = arith.cmpf oge, %7, %82 : vector<16x32xf32>
      %84 = arith.extui %83 : vector<16x32xi1> to vector<16x32xi32>
      %85 = arith.sitofp %84 : vector<16x32xi32> to vector<16x32xf32>
      %cst_32 = arith.constant 1.000000e+00 : f32
      %86 = vector.broadcast %cst_32 : f32 to vector<16x32xf32>
      %87 = arith.subf %86, %85 : vector<16x32xf32>
      %88 = arith.mulf %78, %87 : vector<16x32xf32>
      %89 = vector.broadcast %26 : vector<1x32xf32> to vector<16x32xf32>
      %90 = arith.cmpf oge, %7, %89 : vector<16x32xf32>
      %91 = arith.extui %90 : vector<16x32xi1> to vector<16x32xi32>
      %92 = arith.sitofp %91 : vector<16x32xi32> to vector<16x32xf32>
      %cst_33 = arith.constant 1.000000e+00 : f32
      %93 = vector.broadcast %cst_33 : f32 to vector<16x32xf32>
      %94 = arith.subf %93, %92 : vector<16x32xf32>
      %95 = arith.mulf %85, %94 : vector<16x32xf32>
      %96 = vector.broadcast %27 : vector<1x32xf32> to vector<16x32xf32>
      %97 = arith.cmpf oge, %7, %96 : vector<16x32xf32>
      %98 = arith.extui %97 : vector<16x32xi1> to vector<16x32xi32>
      %99 = arith.sitofp %98 : vector<16x32xi32> to vector<16x32xf32>
      %cst_34 = arith.constant 1.000000e+00 : f32
      %100 = vector.broadcast %cst_34 : f32 to vector<16x32xf32>
      %101 = arith.subf %100, %99 : vector<16x32xf32>
      %102 = arith.mulf %92, %101 : vector<16x32xf32>
      %103 = vector.broadcast %28 : vector<1x32xf32> to vector<16x32xf32>
      %104 = arith.cmpf oge, %7, %103 : vector<16x32xf32>
      %105 = arith.extui %104 : vector<16x32xi1> to vector<16x32xi32>
      %106 = arith.sitofp %105 : vector<16x32xi32> to vector<16x32xf32>
      %cst_35 = arith.constant 1.000000e+00 : f32
      %107 = vector.broadcast %cst_35 : f32 to vector<16x32xf32>
      %108 = arith.subf %107, %106 : vector<16x32xf32>
      %109 = arith.mulf %99, %108 : vector<16x32xf32>
      %110 = vector.broadcast %17 : vector<1x32xf32> to vector<16x32xf32>
      %111 = arith.subf %7, %110 : vector<16x32xf32>
      %c0_36 = arith.constant 0 : index
      %c0_37 = arith.constant 0 : index
      %112 = vector.load %arg4[%c0_36, %c0_37] : memref<36x32xf32, #tpu.memory_space<vmem>>, vector<1x32xf32>
      %113 = vector.broadcast %112 : vector<1x32xf32> to vector<16x32xf32>
      %114 = arith.mulf %111, %113 : vector<16x32xf32>
      %115 = arith.mulf %114, %39 : vector<16x32xf32>
      %116 = vector.broadcast %19 : vector<1x32xf32> to vector<16x32xf32>
      %117 = arith.subf %116, %7 : vector<16x32xf32>
      %c1_38 = arith.constant 1 : index
      %c0_39 = arith.constant 0 : index
      %118 = vector.load %arg4[%c1_38, %c0_39] : memref<36x32xf32, #tpu.memory_space<vmem>>, vector<1x32xf32>
      %119 = vector.broadcast %118 : vector<1x32xf32> to vector<16x32xf32>
      %120 = arith.mulf %117, %119 : vector<16x32xf32>
      %121 = arith.mulf %120, %46 : vector<16x32xf32>
      %122 = arith.addf %115, %121 : vector<16x32xf32>
      %123 = vector.broadcast %18 : vector<1x32xf32> to vector<16x32xf32>
      %124 = arith.subf %7, %123 : vector<16x32xf32>
      %c1_40 = arith.constant 1 : index
      %c0_41 = arith.constant 0 : index
      %125 = vector.load %arg4[%c1_40, %c0_41] : memref<36x32xf32, #tpu.memory_space<vmem>>, vector<1x32xf32>
      %126 = vector.broadcast %125 : vector<1x32xf32> to vector<16x32xf32>
      %127 = arith.mulf %124, %126 : vector<16x32xf32>
      %128 = arith.mulf %127, %46 : vector<16x32xf32>
      %129 = vector.broadcast %20 : vector<1x32xf32> to vector<16x32xf32>
      %130 = arith.subf %129, %7 : vector<16x32xf32>
      %c2_42 = arith.constant 2 : index
      %c0_43 = arith.constant 0 : index
      %131 = vector.load %arg4[%c2_42, %c0_43] : memref<36x32xf32, #tpu.memory_space<vmem>>, vector<1x32xf32>
      %132 = vector.broadcast %131 : vector<1x32xf32> to vector<16x32xf32>
      %133 = arith.mulf %130, %132 : vector<16x32xf32>
      %134 = arith.mulf %133, %53 : vector<16x32xf32>
      %135 = arith.addf %128, %134 : vector<16x32xf32>
      %136 = vector.broadcast %19 : vector<1x32xf32> to vector<16x32xf32>
      %137 = arith.subf %7, %136 : vector<16x32xf32>
      %c2_44 = arith.constant 2 : index
      %c0_45 = arith.constant 0 : index
      %138 = vector.load %arg4[%c2_44, %c0_45] : memref<36x32xf32, #tpu.memory_space<vmem>>, vector<1x32xf32>
      %139 = vector.broadcast %138 : vector<1x32xf32> to vector<16x32xf32>
      %140 = arith.mulf %137, %139 : vector<16x32xf32>
      %141 = arith.mulf %140, %53 : vector<16x32xf32>
      %142 = vector.broadcast %21 : vector<1x32xf32> to vector<16x32xf32>
      %143 = arith.subf %142, %7 : vector<16x32xf32>
      %c3_46 = arith.constant 3 : index
      %c0_47 = arith.constant 0 : index
      %144 = vector.load %arg4[%c3_46, %c0_47] : memref<36x32xf32, #tpu.memory_space<vmem>>, vector<1x32xf32>
      %145 = vector.broadcast %144 : vector<1x32xf32> to vector<16x32xf32>
      %146 = arith.mulf %143, %145 : vector<16x32xf32>
      %147 = arith.mulf %146, %60 : vector<16x32xf32>
      %148 = arith.addf %141, %147 : vector<16x32xf32>
      %149 = vector.broadcast %20 : vector<1x32xf32> to vector<16x32xf32>
      %150 = arith.subf %7, %149 : vector<16x32xf32>
      %c3_48 = arith.constant 3 : index
      %c0_49 = arith.constant 0 : index
      %151 = vector.load %arg4[%c3_48, %c0_49] : memref<36x32xf32, #tpu.memory_space<vmem>>, vector<1x32xf32>
      %152 = vector.broadcast %151 : vector<1x32xf32> to vector<16x32xf32>
      %153 = arith.mulf %150, %152 : vector<16x32xf32>
      %154 = arith.mulf %153, %60 : vector<16x32xf32>
      %155 = vector.broadcast %22 : vector<1x32xf32> to vector<16x32xf32>
      %156 = arith.subf %155, %7 : vector<16x32xf32>
      %c4_50 = arith.constant 4 : index
      %c0_51 = arith.constant 0 : index
      %157 = vector.load %arg4[%c4_50, %c0_51] : memref<36x32xf32, #tpu.memory_space<vmem>>, vector<1x32xf32>
      %158 = vector.broadcast %157 : vector<1x32xf32> to vector<16x32xf32>
      %159 = arith.mulf %156, %158 : vector<16x32xf32>
      %160 = arith.mulf %159, %67 : vector<16x32xf32>
      %161 = arith.addf %154, %160 : vector<16x32xf32>
      %162 = vector.broadcast %21 : vector<1x32xf32> to vector<16x32xf32>
      %163 = arith.subf %7, %162 : vector<16x32xf32>
      %c4_52 = arith.constant 4 : index
      %c0_53 = arith.constant 0 : index
      %164 = vector.load %arg4[%c4_52, %c0_53] : memref<36x32xf32, #tpu.memory_space<vmem>>, vector<1x32xf32>
      %165 = vector.broadcast %164 : vector<1x32xf32> to vector<16x32xf32>
      %166 = arith.mulf %163, %165 : vector<16x32xf32>
      %167 = arith.mulf %166, %67 : vector<16x32xf32>
      %168 = vector.broadcast %23 : vector<1x32xf32> to vector<16x32xf32>
      %169 = arith.subf %168, %7 : vector<16x32xf32>
      %c5_54 = arith.constant 5 : index
      %c0_55 = arith.constant 0 : index
      %170 = vector.load %arg4[%c5_54, %c0_55] : memref<36x32xf32, #tpu.memory_space<vmem>>, vector<1x32xf32>
      %171 = vector.broadcast %170 : vector<1x32xf32> to vector<16x32xf32>
      %172 = arith.mulf %169, %171 : vector<16x32xf32>
      %173 = arith.mulf %172, %74 : vector<16x32xf32>
      %174 = arith.addf %167, %173 : vector<16x32xf32>
      %175 = vector.broadcast %22 : vector<1x32xf32> to vector<16x32xf32>
      %176 = arith.subf %7, %175 : vector<16x32xf32>
      %c5_56 = arith.constant 5 : index
      %c0_57 = arith.constant 0 : index
      %177 = vector.load %arg4[%c5_56, %c0_57] : memref<36x32xf32, #tpu.memory_space<vmem>>, vector<1x32xf32>
      %178 = vector.broadcast %177 : vector<1x32xf32> to vector<16x32xf32>
      %179 = arith.mulf %176, %178 : vector<16x32xf32>
      %180 = arith.mulf %179, %74 : vector<16x32xf32>
      %181 = vector.broadcast %24 : vector<1x32xf32> to vector<16x32xf32>
      %182 = arith.subf %181, %7 : vector<16x32xf32>
      %c6_58 = arith.constant 6 : index
      %c0_59 = arith.constant 0 : index
      %183 = vector.load %arg4[%c6_58, %c0_59] : memref<36x32xf32, #tpu.memory_space<vmem>>, vector<1x32xf32>
      %184 = vector.broadcast %183 : vector<1x32xf32> to vector<16x32xf32>
      %185 = arith.mulf %182, %184 : vector<16x32xf32>
      %186 = arith.mulf %185, %81 : vector<16x32xf32>
      %187 = arith.addf %180, %186 : vector<16x32xf32>
      %188 = vector.broadcast %23 : vector<1x32xf32> to vector<16x32xf32>
      %189 = arith.subf %7, %188 : vector<16x32xf32>
      %c6_60 = arith.constant 6 : index
      %c0_61 = arith.constant 0 : index
      %190 = vector.load %arg4[%c6_60, %c0_61] : memref<36x32xf32, #tpu.memory_space<vmem>>, vector<1x32xf32>
      %191 = vector.broadcast %190 : vector<1x32xf32> to vector<16x32xf32>
      %192 = arith.mulf %189, %191 : vector<16x32xf32>
      %193 = arith.mulf %192, %81 : vector<16x32xf32>
      %194 = vector.broadcast %25 : vector<1x32xf32> to vector<16x32xf32>
      %195 = arith.subf %194, %7 : vector<16x32xf32>
      %c7_62 = arith.constant 7 : index
      %c0_63 = arith.constant 0 : index
      %196 = vector.load %arg4[%c7_62, %c0_63] : memref<36x32xf32, #tpu.memory_space<vmem>>, vector<1x32xf32>
      %197 = vector.broadcast %196 : vector<1x32xf32> to vector<16x32xf32>
      %198 = arith.mulf %195, %197 : vector<16x32xf32>
      %199 = arith.mulf %198, %88 : vector<16x32xf32>
      %200 = arith.addf %193, %199 : vector<16x32xf32>
      %201 = vector.broadcast %24 : vector<1x32xf32> to vector<16x32xf32>
      %202 = arith.subf %7, %201 : vector<16x32xf32>
      %c7_64 = arith.constant 7 : index
      %c0_65 = arith.constant 0 : index
      %203 = vector.load %arg4[%c7_64, %c0_65] : memref<36x32xf32, #tpu.memory_space<vmem>>, vector<1x32xf32>
      %204 = vector.broadcast %203 : vector<1x32xf32> to vector<16x32xf32>
      %205 = arith.mulf %202, %204 : vector<16x32xf32>
      %206 = arith.mulf %205, %88 : vector<16x32xf32>
      %207 = vector.broadcast %26 : vector<1x32xf32> to vector<16x32xf32>
      %208 = arith.subf %207, %7 : vector<16x32xf32>
      %c8_66 = arith.constant 8 : index
      %c0_67 = arith.constant 0 : index
      %209 = vector.load %arg4[%c8_66, %c0_67] : memref<36x32xf32, #tpu.memory_space<vmem>>, vector<1x32xf32>
      %210 = vector.broadcast %209 : vector<1x32xf32> to vector<16x32xf32>
      %211 = arith.mulf %208, %210 : vector<16x32xf32>
      %212 = arith.mulf %211, %95 : vector<16x32xf32>
      %213 = arith.addf %206, %212 : vector<16x32xf32>
      %214 = vector.broadcast %25 : vector<1x32xf32> to vector<16x32xf32>
      %215 = arith.subf %7, %214 : vector<16x32xf32>
      %c8_68 = arith.constant 8 : index
      %c0_69 = arith.constant 0 : index
      %216 = vector.load %arg4[%c8_68, %c0_69] : memref<36x32xf32, #tpu.memory_space<vmem>>, vector<1x32xf32>
      %217 = vector.broadcast %216 : vector<1x32xf32> to vector<16x32xf32>
      %218 = arith.mulf %215, %217 : vector<16x32xf32>
      %219 = arith.mulf %218, %95 : vector<16x32xf32>
      %220 = vector.broadcast %27 : vector<1x32xf32> to vector<16x32xf32>
      %221 = arith.subf %220, %7 : vector<16x32xf32>
      %c9_70 = arith.constant 9 : index
      %c0_71 = arith.constant 0 : index
      %222 = vector.load %arg4[%c9_70, %c0_71] : memref<36x32xf32, #tpu.memory_space<vmem>>, vector<1x32xf32>
      %223 = vector.broadcast %222 : vector<1x32xf32> to vector<16x32xf32>
      %224 = arith.mulf %221, %223 : vector<16x32xf32>
      %225 = arith.mulf %224, %102 : vector<16x32xf32>
      %226 = arith.addf %219, %225 : vector<16x32xf32>
      %227 = vector.broadcast %26 : vector<1x32xf32> to vector<16x32xf32>
      %228 = arith.subf %7, %227 : vector<16x32xf32>
      %c9_72 = arith.constant 9 : index
      %c0_73 = arith.constant 0 : index
      %229 = vector.load %arg4[%c9_72, %c0_73] : memref<36x32xf32, #tpu.memory_space<vmem>>, vector<1x32xf32>
      %230 = vector.broadcast %229 : vector<1x32xf32> to vector<16x32xf32>
      %231 = arith.mulf %228, %230 : vector<16x32xf32>
      %232 = arith.mulf %231, %102 : vector<16x32xf32>
      %233 = vector.broadcast %28 : vector<1x32xf32> to vector<16x32xf32>
      %234 = arith.subf %233, %7 : vector<16x32xf32>
      %c10_74 = arith.constant 10 : index
      %c0_75 = arith.constant 0 : index
      %235 = vector.load %arg4[%c10_74, %c0_75] : memref<36x32xf32, #tpu.memory_space<vmem>>, vector<1x32xf32>
      %236 = vector.broadcast %235 : vector<1x32xf32> to vector<16x32xf32>
      %237 = arith.mulf %234, %236 : vector<16x32xf32>
      %238 = arith.mulf %237, %109 : vector<16x32xf32>
      %239 = arith.addf %232, %238 : vector<16x32xf32>
      %240 = vector.broadcast %17 : vector<1x32xf32> to vector<16x32xf32>
      %241 = arith.subf %7, %240 : vector<16x32xf32>
      %c12 = arith.constant 12 : index
      %c0_76 = arith.constant 0 : index
      %242 = vector.load %arg4[%c12, %c0_76] : memref<36x32xf32, #tpu.memory_space<vmem>>, vector<1x32xf32>
      %243 = vector.broadcast %242 : vector<1x32xf32> to vector<16x32xf32>
      %244 = arith.mulf %241, %243 : vector<16x32xf32>
      %245 = arith.mulf %244, %122 : vector<16x32xf32>
      %246 = vector.broadcast %20 : vector<1x32xf32> to vector<16x32xf32>
      %247 = arith.subf %246, %7 : vector<16x32xf32>
      %c13 = arith.constant 13 : index
      %c0_77 = arith.constant 0 : index
      %248 = vector.load %arg4[%c13, %c0_77] : memref<36x32xf32, #tpu.memory_space<vmem>>, vector<1x32xf32>
      %249 = vector.broadcast %248 : vector<1x32xf32> to vector<16x32xf32>
      %250 = arith.mulf %247, %249 : vector<16x32xf32>
      %251 = arith.mulf %250, %135 : vector<16x32xf32>
      %252 = arith.addf %245, %251 : vector<16x32xf32>
      %253 = vector.broadcast %18 : vector<1x32xf32> to vector<16x32xf32>
      %254 = arith.subf %7, %253 : vector<16x32xf32>
      %c13_78 = arith.constant 13 : index
      %c0_79 = arith.constant 0 : index
      %255 = vector.load %arg4[%c13_78, %c0_79] : memref<36x32xf32, #tpu.memory_space<vmem>>, vector<1x32xf32>
      %256 = vector.broadcast %255 : vector<1x32xf32> to vector<16x32xf32>
      %257 = arith.mulf %254, %256 : vector<16x32xf32>
      %258 = arith.mulf %257, %135 : vector<16x32xf32>
      %259 = vector.broadcast %21 : vector<1x32xf32> to vector<16x32xf32>
      %260 = arith.subf %259, %7 : vector<16x32xf32>
      %c14 = arith.constant 14 : index
      %c0_80 = arith.constant 0 : index
      %261 = vector.load %arg4[%c14, %c0_80] : memref<36x32xf32, #tpu.memory_space<vmem>>, vector<1x32xf32>
      %262 = vector.broadcast %261 : vector<1x32xf32> to vector<16x32xf32>
      %263 = arith.mulf %260, %262 : vector<16x32xf32>
      %264 = arith.mulf %263, %148 : vector<16x32xf32>
      %265 = arith.addf %258, %264 : vector<16x32xf32>
      %266 = vector.broadcast %19 : vector<1x32xf32> to vector<16x32xf32>
      %267 = arith.subf %7, %266 : vector<16x32xf32>
      %c14_81 = arith.constant 14 : index
      %c0_82 = arith.constant 0 : index
      %268 = vector.load %arg4[%c14_81, %c0_82] : memref<36x32xf32, #tpu.memory_space<vmem>>, vector<1x32xf32>
      %269 = vector.broadcast %268 : vector<1x32xf32> to vector<16x32xf32>
      %270 = arith.mulf %267, %269 : vector<16x32xf32>
      %271 = arith.mulf %270, %148 : vector<16x32xf32>
      %272 = vector.broadcast %22 : vector<1x32xf32> to vector<16x32xf32>
      %273 = arith.subf %272, %7 : vector<16x32xf32>
      %c15 = arith.constant 15 : index
      %c0_83 = arith.constant 0 : index
      %274 = vector.load %arg4[%c15, %c0_83] : memref<36x32xf32, #tpu.memory_space<vmem>>, vector<1x32xf32>
      %275 = vector.broadcast %274 : vector<1x32xf32> to vector<16x32xf32>
      %276 = arith.mulf %273, %275 : vector<16x32xf32>
      %277 = arith.mulf %276, %161 : vector<16x32xf32>
      %278 = arith.addf %271, %277 : vector<16x32xf32>
      %279 = vector.broadcast %20 : vector<1x32xf32> to vector<16x32xf32>
      %280 = arith.subf %7, %279 : vector<16x32xf32>
      %c15_84 = arith.constant 15 : index
      %c0_85 = arith.constant 0 : index
      %281 = vector.load %arg4[%c15_84, %c0_85] : memref<36x32xf32, #tpu.memory_space<vmem>>, vector<1x32xf32>
      %282 = vector.broadcast %281 : vector<1x32xf32> to vector<16x32xf32>
      %283 = arith.mulf %280, %282 : vector<16x32xf32>
      %284 = arith.mulf %283, %161 : vector<16x32xf32>
      %285 = vector.broadcast %23 : vector<1x32xf32> to vector<16x32xf32>
      %286 = arith.subf %285, %7 : vector<16x32xf32>
      %c16 = arith.constant 16 : index
      %c0_86 = arith.constant 0 : index
      %287 = vector.load %arg4[%c16, %c0_86] : memref<36x32xf32, #tpu.memory_space<vmem>>, vector<1x32xf32>
      %288 = vector.broadcast %287 : vector<1x32xf32> to vector<16x32xf32>
      %289 = arith.mulf %286, %288 : vector<16x32xf32>
      %290 = arith.mulf %289, %174 : vector<16x32xf32>
      %291 = arith.addf %284, %290 : vector<16x32xf32>
      %292 = vector.broadcast %21 : vector<1x32xf32> to vector<16x32xf32>
      %293 = arith.subf %7, %292 : vector<16x32xf32>
      %c16_87 = arith.constant 16 : index
      %c0_88 = arith.constant 0 : index
      %294 = vector.load %arg4[%c16_87, %c0_88] : memref<36x32xf32, #tpu.memory_space<vmem>>, vector<1x32xf32>
      %295 = vector.broadcast %294 : vector<1x32xf32> to vector<16x32xf32>
      %296 = arith.mulf %293, %295 : vector<16x32xf32>
      %297 = arith.mulf %296, %174 : vector<16x32xf32>
      %298 = vector.broadcast %24 : vector<1x32xf32> to vector<16x32xf32>
      %299 = arith.subf %298, %7 : vector<16x32xf32>
      %c17 = arith.constant 17 : index
      %c0_89 = arith.constant 0 : index
      %300 = vector.load %arg4[%c17, %c0_89] : memref<36x32xf32, #tpu.memory_space<vmem>>, vector<1x32xf32>
      %301 = vector.broadcast %300 : vector<1x32xf32> to vector<16x32xf32>
      %302 = arith.mulf %299, %301 : vector<16x32xf32>
      %303 = arith.mulf %302, %187 : vector<16x32xf32>
      %304 = arith.addf %297, %303 : vector<16x32xf32>
      %305 = vector.broadcast %22 : vector<1x32xf32> to vector<16x32xf32>
      %306 = arith.subf %7, %305 : vector<16x32xf32>
      %c17_90 = arith.constant 17 : index
      %c0_91 = arith.constant 0 : index
      %307 = vector.load %arg4[%c17_90, %c0_91] : memref<36x32xf32, #tpu.memory_space<vmem>>, vector<1x32xf32>
      %308 = vector.broadcast %307 : vector<1x32xf32> to vector<16x32xf32>
      %309 = arith.mulf %306, %308 : vector<16x32xf32>
      %310 = arith.mulf %309, %187 : vector<16x32xf32>
      %311 = vector.broadcast %25 : vector<1x32xf32> to vector<16x32xf32>
      %312 = arith.subf %311, %7 : vector<16x32xf32>
      %c18 = arith.constant 18 : index
      %c0_92 = arith.constant 0 : index
      %313 = vector.load %arg4[%c18, %c0_92] : memref<36x32xf32, #tpu.memory_space<vmem>>, vector<1x32xf32>
      %314 = vector.broadcast %313 : vector<1x32xf32> to vector<16x32xf32>
      %315 = arith.mulf %312, %314 : vector<16x32xf32>
      %316 = arith.mulf %315, %200 : vector<16x32xf32>
      %317 = arith.addf %310, %316 : vector<16x32xf32>
      %318 = vector.broadcast %23 : vector<1x32xf32> to vector<16x32xf32>
      %319 = arith.subf %7, %318 : vector<16x32xf32>
      %c18_93 = arith.constant 18 : index
      %c0_94 = arith.constant 0 : index
      %320 = vector.load %arg4[%c18_93, %c0_94] : memref<36x32xf32, #tpu.memory_space<vmem>>, vector<1x32xf32>
      %321 = vector.broadcast %320 : vector<1x32xf32> to vector<16x32xf32>
      %322 = arith.mulf %319, %321 : vector<16x32xf32>
      %323 = arith.mulf %322, %200 : vector<16x32xf32>
      %324 = vector.broadcast %26 : vector<1x32xf32> to vector<16x32xf32>
      %325 = arith.subf %324, %7 : vector<16x32xf32>
      %c19 = arith.constant 19 : index
      %c0_95 = arith.constant 0 : index
      %326 = vector.load %arg4[%c19, %c0_95] : memref<36x32xf32, #tpu.memory_space<vmem>>, vector<1x32xf32>
      %327 = vector.broadcast %326 : vector<1x32xf32> to vector<16x32xf32>
      %328 = arith.mulf %325, %327 : vector<16x32xf32>
      %329 = arith.mulf %328, %213 : vector<16x32xf32>
      %330 = arith.addf %323, %329 : vector<16x32xf32>
      %331 = vector.broadcast %24 : vector<1x32xf32> to vector<16x32xf32>
      %332 = arith.subf %7, %331 : vector<16x32xf32>
      %c19_96 = arith.constant 19 : index
      %c0_97 = arith.constant 0 : index
      %333 = vector.load %arg4[%c19_96, %c0_97] : memref<36x32xf32, #tpu.memory_space<vmem>>, vector<1x32xf32>
      %334 = vector.broadcast %333 : vector<1x32xf32> to vector<16x32xf32>
      %335 = arith.mulf %332, %334 : vector<16x32xf32>
      %336 = arith.mulf %335, %213 : vector<16x32xf32>
      %337 = vector.broadcast %27 : vector<1x32xf32> to vector<16x32xf32>
      %338 = arith.subf %337, %7 : vector<16x32xf32>
      %c20 = arith.constant 20 : index
      %c0_98 = arith.constant 0 : index
      %339 = vector.load %arg4[%c20, %c0_98] : memref<36x32xf32, #tpu.memory_space<vmem>>, vector<1x32xf32>
      %340 = vector.broadcast %339 : vector<1x32xf32> to vector<16x32xf32>
      %341 = arith.mulf %338, %340 : vector<16x32xf32>
      %342 = arith.mulf %341, %226 : vector<16x32xf32>
      %343 = arith.addf %336, %342 : vector<16x32xf32>
      %344 = vector.broadcast %25 : vector<1x32xf32> to vector<16x32xf32>
      %345 = arith.subf %7, %344 : vector<16x32xf32>
      %c20_99 = arith.constant 20 : index
      %c0_100 = arith.constant 0 : index
      %346 = vector.load %arg4[%c20_99, %c0_100] : memref<36x32xf32, #tpu.memory_space<vmem>>, vector<1x32xf32>
      %347 = vector.broadcast %346 : vector<1x32xf32> to vector<16x32xf32>
      %348 = arith.mulf %345, %347 : vector<16x32xf32>
      %349 = arith.mulf %348, %226 : vector<16x32xf32>
      %350 = vector.broadcast %28 : vector<1x32xf32> to vector<16x32xf32>
      %351 = arith.subf %350, %7 : vector<16x32xf32>
      %c21 = arith.constant 21 : index
      %c0_101 = arith.constant 0 : index
      %352 = vector.load %arg4[%c21, %c0_101] : memref<36x32xf32, #tpu.memory_space<vmem>>, vector<1x32xf32>
      %353 = vector.broadcast %352 : vector<1x32xf32> to vector<16x32xf32>
      %354 = arith.mulf %351, %353 : vector<16x32xf32>
      %355 = arith.mulf %354, %239 : vector<16x32xf32>
      %356 = arith.addf %349, %355 : vector<16x32xf32>
      %357 = vector.broadcast %17 : vector<1x32xf32> to vector<16x32xf32>
      %358 = arith.subf %7, %357 : vector<16x32xf32>
      %c24 = arith.constant 24 : index
      %c0_102 = arith.constant 0 : index
      %359 = vector.load %arg4[%c24, %c0_102] : memref<36x32xf32, #tpu.memory_space<vmem>>, vector<1x32xf32>
      %360 = vector.broadcast %359 : vector<1x32xf32> to vector<16x32xf32>
      %361 = arith.mulf %358, %360 : vector<16x32xf32>
      %362 = arith.mulf %361, %252 : vector<16x32xf32>
      %363 = vector.broadcast %21 : vector<1x32xf32> to vector<16x32xf32>
      %364 = arith.subf %363, %7 : vector<16x32xf32>
      %c25 = arith.constant 25 : index
      %c0_103 = arith.constant 0 : index
      %365 = vector.load %arg4[%c25, %c0_103] : memref<36x32xf32, #tpu.memory_space<vmem>>, vector<1x32xf32>
      %366 = vector.broadcast %365 : vector<1x32xf32> to vector<16x32xf32>
      %367 = arith.mulf %364, %366 : vector<16x32xf32>
      %368 = arith.mulf %367, %265 : vector<16x32xf32>
      %369 = arith.addf %362, %368 : vector<16x32xf32>
      %370 = arith.truncf %369 : vector<16x32xf32> to vector<16x32xbf16>
      %c0_104 = arith.constant 0 : index
      %c32 = arith.constant 32 : index
      %371 = vector.load %arg7[%c0_104, %c32] : memref<16x288xbf16, #tpu.memory_space<vmem>>, vector<16x32xbf16>
      tpu.vector_store %arg7[%c0_104, %c32], %370 {strides = array<i32>} : memref<16x288xbf16, #tpu.memory_space<vmem>>, vector<16x32xbf16>,
      %372 = vector.broadcast %18 : vector<1x32xf32> to vector<16x32xf32>
      %373 = arith.subf %7, %372 : vector<16x32xf32>
      %c25_105 = arith.constant 25 : index
      %c0_106 = arith.constant 0 : index
      %374 = vector.load %arg4[%c25_105, %c0_106] : memref<36x32xf32, #tpu.memory_space<vmem>>, vector<1x32xf32>
      %375 = vector.broadcast %374 : vector<1x32xf32> to vector<16x32xf32>
      %376 = arith.mulf %373, %375 : vector<16x32xf32>
      %377 = arith.mulf %376, %265 : vector<16x32xf32>
      %378 = vector.broadcast %22 : vector<1x32xf32> to vector<16x32xf32>
      %379 = arith.subf %378, %7 : vector<16x32xf32>
      %c26 = arith.constant 26 : index
      %c0_107 = arith.constant 0 : index
      %380 = vector.load %arg4[%c26, %c0_107] : memref<36x32xf32, #tpu.memory_space<vmem>>, vector<1x32xf32>
      %381 = vector.broadcast %380 : vector<1x32xf32> to vector<16x32xf32>
      %382 = arith.mulf %379, %381 : vector<16x32xf32>
      %383 = arith.mulf %382, %278 : vector<16x32xf32>
      %384 = arith.addf %377, %383 : vector<16x32xf32>
      %385 = arith.truncf %384 : vector<16x32xf32> to vector<16x32xbf16>
      %c0_108 = arith.constant 0 : index
      %c64 = arith.constant 64 : index
      %386 = vector.load %arg7[%c0_108, %c64] : memref<16x288xbf16, #tpu.memory_space<vmem>>, vector<16x32xbf16>
      tpu.vector_store %arg7[%c0_108, %c64], %385 {strides = array<i32>} : memref<16x288xbf16, #tpu.memory_space<vmem>>, vector<16x32xbf16>,
      %387 = vector.broadcast %19 : vector<1x32xf32> to vector<16x32xf32>
      %388 = arith.subf %7, %387 : vector<16x32xf32>
      %c26_109 = arith.constant 26 : index
      %c0_110 = arith.constant 0 : index
      %389 = vector.load %arg4[%c26_109, %c0_110] : memref<36x32xf32, #tpu.memory_space<vmem>>, vector<1x32xf32>
      %390 = vector.broadcast %389 : vector<1x32xf32> to vector<16x32xf32>
      %391 = arith.mulf %388, %390 : vector<16x32xf32>
      %392 = arith.mulf %391, %278 : vector<16x32xf32>
      %393 = vector.broadcast %23 : vector<1x32xf32> to vector<16x32xf32>
      %394 = arith.subf %393, %7 : vector<16x32xf32>
      %c27 = arith.constant 27 : index
      %c0_111 = arith.constant 0 : index
      %395 = vector.load %arg4[%c27, %c0_111] : memref<36x32xf32, #tpu.memory_space<vmem>>, vector<1x32xf32>
      %396 = vector.broadcast %395 : vector<1x32xf32> to vector<16x32xf32>
      %397 = arith.mulf %394, %396 : vector<16x32xf32>
      %398 = arith.mulf %397, %291 : vector<16x32xf32>
      %399 = arith.addf %392, %398 : vector<16x32xf32>
      %400 = arith.truncf %399 : vector<16x32xf32> to vector<16x32xbf16>
      %c0_112 = arith.constant 0 : index
      %c96 = arith.constant 96 : index
      %401 = vector.load %arg7[%c0_112, %c96] : memref<16x288xbf16, #tpu.memory_space<vmem>>, vector<16x32xbf16>
      tpu.vector_store %arg7[%c0_112, %c96], %400 {strides = array<i32>} : memref<16x288xbf16, #tpu.memory_space<vmem>>, vector<16x32xbf16>,
      %402 = vector.broadcast %20 : vector<1x32xf32> to vector<16x32xf32>
      %403 = arith.subf %7, %402 : vector<16x32xf32>
      %c27_113 = arith.constant 27 : index
      %c0_114 = arith.constant 0 : index
      %404 = vector.load %arg4[%c27_113, %c0_114] : memref<36x32xf32, #tpu.memory_space<vmem>>, vector<1x32xf32>
      %405 = vector.broadcast %404 : vector<1x32xf32> to vector<16x32xf32>
      %406 = arith.mulf %403, %405 : vector<16x32xf32>
      %407 = arith.mulf %406, %291 : vector<16x32xf32>
      %408 = vector.broadcast %24 : vector<1x32xf32> to vector<16x32xf32>
      %409 = arith.subf %408, %7 : vector<16x32xf32>
      %c28 = arith.constant 28 : index
      %c0_115 = arith.constant 0 : index
      %410 = vector.load %arg4[%c28, %c0_115] : memref<36x32xf32, #tpu.memory_space<vmem>>, vector<1x32xf32>
      %411 = vector.broadcast %410 : vector<1x32xf32> to vector<16x32xf32>
      %412 = arith.mulf %409, %411 : vector<16x32xf32>
      %413 = arith.mulf %412, %304 : vector<16x32xf32>
      %414 = arith.addf %407, %413 : vector<16x32xf32>
      %415 = arith.truncf %414 : vector<16x32xf32> to vector<16x32xbf16>
      %c0_116 = arith.constant 0 : index
      %c128 = arith.constant 128 : index
      %416 = vector.load %arg7[%c0_116, %c128] : memref<16x288xbf16, #tpu.memory_space<vmem>>, vector<16x32xbf16>
      tpu.vector_store %arg7[%c0_116, %c128], %415 {strides = array<i32>} : memref<16x288xbf16, #tpu.memory_space<vmem>>, vector<16x32xbf16>,
      %417 = vector.broadcast %21 : vector<1x32xf32> to vector<16x32xf32>
      %418 = arith.subf %7, %417 : vector<16x32xf32>
      %c28_117 = arith.constant 28 : index
      %c0_118 = arith.constant 0 : index
      %419 = vector.load %arg4[%c28_117, %c0_118] : memref<36x32xf32, #tpu.memory_space<vmem>>, vector<1x32xf32>
      %420 = vector.broadcast %419 : vector<1x32xf32> to vector<16x32xf32>
      %421 = arith.mulf %418, %420 : vector<16x32xf32>
      %422 = arith.mulf %421, %304 : vector<16x32xf32>
      %423 = vector.broadcast %25 : vector<1x32xf32> to vector<16x32xf32>
      %424 = arith.subf %423, %7 : vector<16x32xf32>
      %c29 = arith.constant 29 : index
      %c0_119 = arith.constant 0 : index
      %425 = vector.load %arg4[%c29, %c0_119] : memref<36x32xf32, #tpu.memory_space<vmem>>, vector<1x32xf32>
      %426 = vector.broadcast %425 : vector<1x32xf32> to vector<16x32xf32>
      %427 = arith.mulf %424, %426 : vector<16x32xf32>
      %428 = arith.mulf %427, %317 : vector<16x32xf32>
      %429 = arith.addf %422, %428 : vector<16x32xf32>
      %430 = arith.truncf %429 : vector<16x32xf32> to vector<16x32xbf16>
      %c0_120 = arith.constant 0 : index
      %c160 = arith.constant 160 : index
      %431 = vector.load %arg7[%c0_120, %c160] : memref<16x288xbf16, #tpu.memory_space<vmem>>, vector<16x32xbf16>
      tpu.vector_store %arg7[%c0_120, %c160], %430 {strides = array<i32>} : memref<16x288xbf16, #tpu.memory_space<vmem>>, vector<16x32xbf16>,
      %432 = vector.broadcast %22 : vector<1x32xf32> to vector<16x32xf32>
      %433 = arith.subf %7, %432 : vector<16x32xf32>
      %c29_121 = arith.constant 29 : index
      %c0_122 = arith.constant 0 : index
      %434 = vector.load %arg4[%c29_121, %c0_122] : memref<36x32xf32, #tpu.memory_space<vmem>>, vector<1x32xf32>
      %435 = vector.broadcast %434 : vector<1x32xf32> to vector<16x32xf32>
      %436 = arith.mulf %433, %435 : vector<16x32xf32>
      %437 = arith.mulf %436, %317 : vector<16x32xf32>
      %438 = vector.broadcast %26 : vector<1x32xf32> to vector<16x32xf32>
      %439 = arith.subf %438, %7 : vector<16x32xf32>
      %c30 = arith.constant 30 : index
      %c0_123 = arith.constant 0 : index
      %440 = vector.load %arg4[%c30, %c0_123] : memref<36x32xf32, #tpu.memory_space<vmem>>, vector<1x32xf32>
      %441 = vector.broadcast %440 : vector<1x32xf32> to vector<16x32xf32>
      %442 = arith.mulf %439, %441 : vector<16x32xf32>
      %443 = arith.mulf %442, %330 : vector<16x32xf32>
      %444 = arith.addf %437, %443 : vector<16x32xf32>
      %445 = arith.truncf %444 : vector<16x32xf32> to vector<16x32xbf16>
      %c0_124 = arith.constant 0 : index
      %c192 = arith.constant 192 : index
      %446 = vector.load %arg7[%c0_124, %c192] : memref<16x288xbf16, #tpu.memory_space<vmem>>, vector<16x32xbf16>
      tpu.vector_store %arg7[%c0_124, %c192], %445 {strides = array<i32>} : memref<16x288xbf16, #tpu.memory_space<vmem>>, vector<16x32xbf16>,
      %447 = vector.broadcast %23 : vector<1x32xf32> to vector<16x32xf32>
      %448 = arith.subf %7, %447 : vector<16x32xf32>
      %c30_125 = arith.constant 30 : index
      %c0_126 = arith.constant 0 : index
      %449 = vector.load %arg4[%c30_125, %c0_126] : memref<36x32xf32, #tpu.memory_space<vmem>>, vector<1x32xf32>
      %450 = vector.broadcast %449 : vector<1x32xf32> to vector<16x32xf32>
      %451 = arith.mulf %448, %450 : vector<16x32xf32>
      %452 = arith.mulf %451, %330 : vector<16x32xf32>
      %453 = vector.broadcast %27 : vector<1x32xf32> to vector<16x32xf32>
      %454 = arith.subf %453, %7 : vector<16x32xf32>
      %c31 = arith.constant 31 : index
      %c0_127 = arith.constant 0 : index
      %455 = vector.load %arg4[%c31, %c0_127] : memref<36x32xf32, #tpu.memory_space<vmem>>, vector<1x32xf32>
      %456 = vector.broadcast %455 : vector<1x32xf32> to vector<16x32xf32>
      %457 = arith.mulf %454, %456 : vector<16x32xf32>
      %458 = arith.mulf %457, %343 : vector<16x32xf32>
      %459 = arith.addf %452, %458 : vector<16x32xf32>
      %460 = arith.truncf %459 : vector<16x32xf32> to vector<16x32xbf16>
      %c0_128 = arith.constant 0 : index
      %c224 = arith.constant 224 : index
      %461 = vector.load %arg7[%c0_128, %c224] : memref<16x288xbf16, #tpu.memory_space<vmem>>, vector<16x32xbf16>
      tpu.vector_store %arg7[%c0_128, %c224], %460 {strides = array<i32>} : memref<16x288xbf16, #tpu.memory_space<vmem>>, vector<16x32xbf16>,
      %462 = vector.broadcast %24 : vector<1x32xf32> to vector<16x32xf32>
      %463 = arith.subf %7, %462 : vector<16x32xf32>
      %c31_129 = arith.constant 31 : index
      %c0_130 = arith.constant 0 : index
      %464 = vector.load %arg4[%c31_129, %c0_130] : memref<36x32xf32, #tpu.memory_space<vmem>>, vector<1x32xf32>
      %465 = vector.broadcast %464 : vector<1x32xf32> to vector<16x32xf32>
      %466 = arith.mulf %463, %465 : vector<16x32xf32>
      %467 = arith.mulf %466, %343 : vector<16x32xf32>
      %468 = vector.broadcast %28 : vector<1x32xf32> to vector<16x32xf32>
      %469 = arith.subf %468, %7 : vector<16x32xf32>
      %c32_131 = arith.constant 32 : index
      %c0_132 = arith.constant 0 : index
      %470 = vector.load %arg4[%c32_131, %c0_132] : memref<36x32xf32, #tpu.memory_space<vmem>>, vector<1x32xf32>
      %471 = vector.broadcast %470 : vector<1x32xf32> to vector<16x32xf32>
      %472 = arith.mulf %469, %471 : vector<16x32xf32>
      %473 = arith.mulf %472, %356 : vector<16x32xf32>
      %474 = arith.addf %467, %473 : vector<16x32xf32>
      %475 = arith.truncf %474 : vector<16x32xf32> to vector<16x32xbf16>
      %c0_133 = arith.constant 0 : index
      %c256 = arith.constant 256 : index
      %476 = vector.load %arg7[%c0_133, %c256] : memref<16x288xbf16, #tpu.memory_space<vmem>>, vector<16x32xbf16>
      tpu.vector_store %arg7[%c0_133, %c256], %475 {strides = array<i32>} : memref<16x288xbf16, #tpu.memory_space<vmem>>, vector<16x32xbf16>,
    } else {
    }
    %c0 = arith.constant 0 : index
    %c0_1 = arith.constant 0 : index
    %3 = vector.load %arg7[%c0, %c0_1] : memref<16x288xbf16, #tpu.memory_space<vmem>>, vector<16x288xbf16>
    %c0_2 = arith.constant 0 : index
    %c0_3 = arith.constant 0 : index
    %4 = vector.load %arg5[%c0_2, %c0_3] : memref<288x128xbf16, #tpu.memory_space<vmem>>, vector<288x128xbf16>
    %cst = arith.constant dense<0.000000e+00> : vector<16x128xf32>
    %5 = tpu.matmul %3, %4, %cst {dimension_numbers = #tpu.dot_dimension_numbers<[1], [0], [0], [1], [0, 0, 1, 1], [], []>} : vector<16x288xbf16>, vector<288x128xbf16>, vector<16x128xf32> -> vector<16x128xf32>
    %c0_4 = arith.constant 0 : index
    %c0_5 = arith.constant 0 : index
    %6 = vector.load %arg6[%c0_4, %c0_5] : memref<16x128xf32, #tpu.memory_space<vmem>>, vector<16x128xf32>
    tpu.vector_store %arg6[%c0_4, %c0_5], %5 {strides = array<i32>} : memref<16x128xf32, #tpu.memory_space<vmem>>, vector<16x128xf32>,
    return
  }
  func.func @transform_0(%arg0: i32, %arg1: i32) -> (i32, i32) {
    %c0_i32 = arith.constant 0 : i32
    %c0_i32_0 = arith.constant 0 : i32
    return %arg0, %c0_i32 : i32, i32
  }
  func.func @transform_1(%arg0: i32, %arg1: i32) -> (i32, i32) {
    %c0_i32 = arith.constant 0 : i32
    %c0_i32_0 = arith.constant 0 : i32
    %c0_i32_1 = arith.constant 0 : i32
    return %c0_i32, %c0_i32_0 : i32, i32
  }
  func.func @transform_2(%arg0: i32, %arg1: i32) -> (i32, i32) {
    %c0_i32 = arith.constant 0 : i32
    %c0_i32_0 = arith.constant 0 : i32
    %c0_i32_1 = arith.constant 0 : i32
    return %c0_i32, %c0_i32_0 : i32, i32
  }
  func.func @transform_3(%arg0: i32, %arg1: i32) -> (i32, i32) {
    %c0_i32 = arith.constant 0 : i32
    %c0_i32_0 = arith.constant 0 : i32
    return %c0_i32, %arg1 : i32, i32
  }
  func.func @transform_4(%arg0: i32, %arg1: i32) -> (i32, i32) {
    %c0_i32 = arith.constant 0 : i32
    return %arg0, %arg1 : i32, i32
  }
}

</mosaic_0001>

<llo_original>
// kernel: tpu_custom_call.1
$region0: #{tpu_custom_call.1}
  #allocation0 [shape = 'u32[]', space=smem, size = 0x4, offset = 0x4, fixed_abs, tag = 'smem constant byte address 0x4 - core index']
  #allocation1 [shape = 'u32[144,128]{1,0:T(1,128)}', space=vmem, size = 0x12000, scoped, tag = 'internal scratch']
  #allocation2 [shape = 'bf16[16,288]{1,0:T(8,128)(2,1)}', space=vmem, size = 0x3000, scoped, tag = 'scratch operand']
  %s0 = inlined_call_operand.vmem [shape: f32[16,32], index: 0, kind: input, shape index: {}]
  %s1 = inlined_call_operand.vmem [shape: f32[12,32], index: 1, kind: input, shape index: {}]
  %s2 = inlined_call_operand.vmem [shape: f32[36,32], index: 2, kind: input, shape index: {}]
  %s3 = inlined_call_operand.hbm [shape: bf16[288,128], index: 3, kind: input, shape index: {}]
  %s4 = inlined_call_operand.hbm [shape: f32[16,128], index: 4, kind: output, shape index: {}]
  %s5 = sld [smem:[#allocation0]]
  $region34: #{tpu_custom_call.1} parent=0
    _
  %s7 = ssub.s32 1, %s5
  %s8 = scalar_select 0, %s7, %s5
  $region1: #{tpu_custom_call.1} parent=0
    #allocation3 [shape = 'u8[73728]{0}', space=vmem, size = 0x12000, scoped, tag = 'input window, operand 3, single buffered']
    #allocation4 [shape = 's32[1]{0}', space=sflag, size = 0x4, scoped, tag = 'scoped memory for tpu_custom_call.1']
    #allocation5 [shape = 's32[1]{0}', space=sflag, size = 0x4, scoped, tag = 'scoped memory for tpu_custom_call.1']
    #allocation6 [shape = 'u8[8192]{0}', space=vmem, size = 0x2000, scoped, tag = 'output window, operand 0, single buffered']
    %9 = vsyncpa [#allocation4], 0
    %10 = vsyncpa [#allocation5], 0
    // Predicated region
    $region2: #{tpu_custom_call.1} parent=1 // pred_check
      _
    $region3: #{tpu_custom_call.1} parent=1 // pred_check_branch
      %12 = sbr.rel (0) target = $region5
    $region4: #{tpu_custom_call.1} parent=1 // pred_region
      _
    $region5: #{tpu_custom_call.1} parent=1 // pred_fallthru
      _
    // Predicated region
    $region6: #{tpu_custom_call.1} parent=1 // pred_check
      _
    $region7: #{tpu_custom_call.1} parent=1 // pred_check_branch
      %14 = sbr.rel (0) target = $region9
    $region8: #{tpu_custom_call.1} parent=1 // pred_region
      _
    $region9: #{tpu_custom_call.1} parent=1 // pred_fallthru
      _
    // Predicated region
    $region10: #{tpu_custom_call.1} parent=1 // pred_check
      _
    $region11: #{tpu_custom_call.1} parent=1 // pred_check_branch
      %16 = sbr.rel (0) target = $region13
    $region12: #{tpu_custom_call.1} parent=1 // pred_region
      _
    $region13: #{tpu_custom_call.1} parent=1 // pred_fallthru
      _
    // Predicated region
    $region14: #{tpu_custom_call.1} parent=1 // pred_check
      _
    $region15: #{tpu_custom_call.1} parent=1 // pred_check_branch
      %18 = sbr.rel (0) target = $region17
    $region16: #{tpu_custom_call.1} parent=1 // pred_region
      %s20 = ssub.s32 2304, 2304
      %21 = vsyncadd [#allocation4], %s20
      %s22 = sshll.u32 [#allocation3], 4
      %s23 = int_to_ptr.vmem [resolvable:$true] %s22
      %28 = dma.hbm_to_vmem [thread:$0]  %s3, 2304, %s23, [#allocation4], 64, 64, 4
    $region17: #{tpu_custom_call.1} parent=1 // pred_fallthru
      _
    // Predicated region
    $region18: #{tpu_custom_call.1} parent=1 // pred_check
      _
    $region19: #{tpu_custom_call.1} parent=1 // pred_check_branch
      %30 = sbr.rel (0) target = $region21
    $region20: #{tpu_custom_call.1} parent=1 // pred_region
      %31 = dma.done [#allocation4], 2304
    $region21: #{tpu_custom_call.1} parent=1 // pred_fallthru
      _
    %p33 = scmp.eq.s32.totalorder 0, 0
    // Predicated region
    $region22: #{tpu_custom_call.1} parent=1 // pred_check
      %p34 = pneg %p33
    $region23: #{tpu_custom_call.1} parent=1 // pred_check_branch
      %36 = sbr.rel (%p34) target = $region25
    $region24: #{tpu_custom_call.1} parent=1 // pred_region
      %v37 = vld [vmem:[%s0] sm:$0xff]
      %v38 = vld [vmem:[%s0 + $0x8] sm:$0xff]
      %v39 = vsub.f32 0.0, %v37
      %v40 = vsub.f32 0.0, %v38
      %v41 = vmul.f32 %v39, 1.442695
      %v42 = vpow.pop %v41
      %v43 = vmul.f32 %v40, 1.442695
      %v44 = vpow.pop %v43
      %v45 = vadd.f32 %v42, 1.0
      %v46 = vadd.f32 %v44, 1.0
      %v47 = vrcp.pop %v45
      %v48 = vrcp.pop %v46
      %v49 = vmul.f32 %v37, %v47
      %v50 = vmul.f32 %v38, %v48
      %v51 = vpack.c.bf16 %v50, %v49
      %v53 = vunpack.c.l.b16 %v51
      %v54 = vunpack.c.h.b16 %v51
      %v55 = vpack.c.b16 %v53, %v53
      %v56 = vpack.c.b16 %v54, %v54
      %vm59 = vcmask 257024
      %60 = vst.msk [vmem:[#allocation2] sm:$0xf] %vm59, %v55
      %61 = vst.msk [vmem:[#allocation2 + $0xc] sm:$0xf] %vm59, %v56
      %v62 = vld [vmem:[%s1] sm:$0x1]
      %v63 = vld [vmem:[%s1 + $0x1] sm:$0x1]
      %v64 = vld [vmem:[%s1 + $0x2] sm:$0x1]
      %v65 = vld [vmem:[%s1 + $0x3] sm:$0x1]
      %v66 = vld [vmem:[%s1 + $0x4] sm:$0x1]
      %v67 = vld [vmem:[%s1 + $0x5] sm:$0x1]
      %v68 = vld [vmem:[%s1 + $0x6] sm:$0x1]
      %v69 = vld [vmem:[%s1 + $0x7] sm:$0x1]
      %v70 = vld [vmem:[%s1 + $0x8] sm:$0x1]
      %v71 = vld [vmem:[%s1 + $0x9] sm:$0x1]
      %v72 = vld [vmem:[%s1 + $0xa] sm:$0x1]
      %v73 = vld [vmem:[%s1 + $0xb] sm:$0x1]
      %v74 = vlaneseq
      %v75 = vshrl.u32 %v74, 7
      %v76 = vsub.s32 0, %v75
      %v77 = vrot.slane %v62, %v76
      %vm78 = vcmp.ge.f32.partialorder %v37, %v77
      %vm79 = vcmp.ge.f32.partialorder %v38, %v77
      %v80 = vsel %vm78, 1, 0
      %v81 = vsel %vm79, 1, 0
      %v82 = vcvt.s32.f32 %v80
      %v83 = vcvt.s32.f32 %v81
      %v84 = vlaneseq
      %v85 = vshrl.u32 %v84, 7
      %v86 = vsub.s32 0, %v85
      %v87 = vrot.slane %v63, %v86
      %vm88 = vcmp.ge.f32.partialorder %v37, %v87
      %vm89 = vcmp.ge.f32.partialorder %v38, %v87
      %v90 = vsel %vm88, 1, 0
      %v91 = vsel %vm89, 1, 0
      %v92 = vcvt.s32.f32 %v90
      %v93 = vcvt.s32.f32 %v91
      %v94 = vsub.f32 1.0, %v92
      %v95 = vsub.f32 1.0, %v93
      %v96 = vmul.f32 %v82, %v94
      %v97 = vmul.f32 %v83, %v95
      %v98 = vlaneseq
      %v99 = vshrl.u32 %v98, 7
      %v100 = vsub.s32 0, %v99
      %v101 = vrot.slane %v64, %v100
      %vm102 = vcmp.ge.f32.partialorder %v37, %v101
      %vm103 = vcmp.ge.f32.partialorder %v38, %v101
      %v104 = vsel %vm102, 1, 0
      %v105 = vsel %vm103, 1, 0
      %v106 = vcvt.s32.f32 %v104
      %v107 = vcvt.s32.f32 %v105
      %v108 = vsub.f32 1.0, %v106
      %v109 = vsub.f32 1.0, %v107
      %v110 = vmul.f32 %v92, %v108
      %v111 = vmul.f32 %v93, %v109
      %v112 = vlaneseq
      %v113 = vshrl.u32 %v112, 7
      %v114 = vsub.s32 0, %v113
      %v115 = vrot.slane %v65, %v114
      %vm116 = vcmp.ge.f32.partialorder %v37, %v115
      %vm117 = vcmp.ge.f32.partialorder %v38, %v115
      %v118 = vsel %vm116, 1, 0
      %v119 = vsel %vm117, 1, 0
      %v120 = vcvt.s32.f32 %v118
      %v121 = vcvt.s32.f32 %v119
      %v122 = vsub.f32 1.0, %v120
      %v123 = vsub.f32 1.0, %v121
      %v124 = vmul.f32 %v106, %v122
      %v125 = vmul.f32 %v107, %v123
      %v126 = vlaneseq
      %v127 = vshrl.u32 %v126, 7
      %v128 = vsub.s32 0, %v127
      %v129 = vrot.slane %v66, %v128
      %vm130 = vcmp.ge.f32.partialorder %v37, %v129
      %vm131 = vcmp.ge.f32.partialorder %v38, %v129
      %v132 = vsel %vm130, 1, 0
      %v133 = vsel %vm131, 1, 0
      %v134 = vcvt.s32.f32 %v132
      %v135 = vcvt.s32.f32 %v133
      %v136 = vsub.f32 1.0, %v134
      %v137 = vsub.f32 1.0, %v135
      %v138 = vmul.f32 %v120, %v136
      %v139 = vmul.f32 %v121, %v137
      %v140 = vlaneseq
      %v141 = vshrl.u32 %v140, 7
      %v142 = vsub.s32 0, %v141
      %v143 = vrot.slane %v67, %v142
      %vm144 = vcmp.ge.f32.partialorder %v37, %v143
      %vm145 = vcmp.ge.f32.partialorder %v38, %v143
      %v146 = vsel %vm144, 1, 0
      %v147 = vsel %vm145, 1, 0
      %v148 = vcvt.s32.f32 %v146
      %v149 = vcvt.s32.f32 %v147
      %v150 = vsub.f32 1.0, %v148
      %v151 = vsub.f32 1.0, %v149
      %v152 = vmul.f32 %v134, %v150
      %v153 = vmul.f32 %v135, %v151
      %v154 = vlaneseq
      %v155 = vshrl.u32 %v154, 7
      %v156 = vsub.s32 0, %v155
      %v157 = vrot.slane %v68, %v156
      %vm158 = vcmp.ge.f32.partialorder %v37, %v157
      %vm159 = vcmp.ge.f32.partialorder %v38, %v157
      %v160 = vsel %vm158, 1, 0
      %v161 = vsel %vm159, 1, 0
      %v162 = vcvt.s32.f32 %v160
      %v163 = vcvt.s32.f32 %v161
      %v164 = vsub.f32 1.0, %v162
      %v165 = vsub.f32 1.0, %v163
      %v166 = vmul.f32 %v148, %v164
      %v167 = vmul.f32 %v149, %v165
      %v168 = vlaneseq
      %v169 = vshrl.u32 %v168, 7
      %v170 = vsub.s32 0, %v169
      %v171 = vrot.slane %v69, %v170
      %vm172 = vcmp.ge.f32.partialorder %v37, %v171
      %vm173 = vcmp.ge.f32.partialorder %v38, %v171
      %v174 = vsel %vm172, 1, 0
      %v175 = vsel %vm173, 1, 0
      %v176 = vcvt.s32.f32 %v174
      %v177 = vcvt.s32.f32 %v175
      %v178 = vsub.f32 1.0, %v176
      %v179 = vsub.f32 1.0, %v177
      %v180 = vmul.f32 %v162, %v178
      %v181 = vmul.f32 %v163, %v179
      %v182 = vlaneseq
      %v183 = vshrl.u32 %v182, 7
      %v184 = vsub.s32 0, %v183
      %v185 = vrot.slane %v70, %v184
      %vm186 = vcmp.ge.f32.partialorder %v37, %v185
      %vm187 = vcmp.ge.f32.partialorder %v38, %v185
      %v188 = vsel %vm186, 1, 0
      %v189 = vsel %vm187, 1, 0
      %v190 = vcvt.s32.f32 %v188
      %v191 = vcvt.s32.f32 %v189
      %v192 = vsub.f32 1.0, %v190
      %v193 = vsub.f32 1.0, %v191
      %v194 = vmul.f32 %v176, %v192
      %v195 = vmul.f32 %v177, %v193
      %v196 = vlaneseq
      %v197 = vshrl.u32 %v196, 7
      %v198 = vsub.s32 0, %v197
      %v199 = vrot.slane %v71, %v198
      %vm200 = vcmp.ge.f32.partialorder %v37, %v199
      %vm201 = vcmp.ge.f32.partialorder %v38, %v199
      %v202 = vsel %vm200, 1, 0
      %v203 = vsel %vm201, 1, 0
      %v204 = vcvt.s32.f32 %v202
      %v205 = vcvt.s32.f32 %v203
      %v206 = vsub.f32 1.0, %v204
      %v207 = vsub.f32 1.0, %v205
      %v208 = vmul.f32 %v190, %v206
      %v209 = vmul.f32 %v191, %v207
      %v210 = vlaneseq
      %v211 = vshrl.u32 %v210, 7
      %v212 = vsub.s32 0, %v211
      %v213 = vrot.slane %v72, %v212
      %vm214 = vcmp.ge.f32.partialorder %v37, %v213
      %vm215 = vcmp.ge.f32.partialorder %v38, %v213
      %v216 = vsel %vm214, 1, 0
      %v217 = vsel %vm215, 1, 0
      %v218 = vcvt.s32.f32 %v216
      %v219 = vcvt.s32.f32 %v217
      %v220 = vsub.f32 1.0, %v218
      %v221 = vsub.f32 1.0, %v219
      %v222 = vmul.f32 %v204, %v220
      %v223 = vmul.f32 %v205, %v221
      %v224 = vlaneseq
      %v225 = vshrl.u32 %v224, 7
      %v226 = vsub.s32 0, %v225
      %v227 = vrot.slane %v73, %v226
      %vm228 = vcmp.ge.f32.partialorder %v37, %v227
      %vm229 = vcmp.ge.f32.partialorder %v38, %v227
      %v230 = vsel %vm228, 1, 0
      %v231 = vsel %vm229, 1, 0
      %v232 = vcvt.s32.f32 %v230
      %v233 = vcvt.s32.f32 %v231
      %v234 = vsub.f32 1.0, %v232
      %v235 = vsub.f32 1.0, %v233
      %v236 = vmul.f32 %v218, %v234
      %v237 = vmul.f32 %v219, %v235
      %v238 = vsub.f32 %v37, %v77
      %v239 = vsub.f32 %v38, %v77
      %v240 = vld [vmem:[%s2] sm:$0x1]
      %v241 = vlaneseq
      %v242 = vshrl.u32 %v241, 7
      %v243 = vsub.s32 0, %v242
      %v244 = vrot.slane %v240, %v243
      %v245 = vmul.f32 %v238, %v244
      %v246 = vmul.f32 %v239, %v244
      %v247 = vmul.f32 %v245, %v96
      %v248 = vmul.f32 %v246, %v97
      %v249 = vsub.f32 %v101, %v37
      %v250 = vsub.f32 %v101, %v38
      %v251 = vld [vmem:[%s2 + $0x1] sm:$0x1]
      %v252 = vlaneseq
      %v253 = vshrl.u32 %v252, 7
      %v254 = vsub.s32 0, %v253
      %v255 = vrot.slane %v251, %v254
      %v256 = vmul.f32 %v249, %v255
      %v257 = vmul.f32 %v250, %v255
      %v258 = vmul.f32 %v256, %v110
      %v259 = vmul.f32 %v257, %v111
      %v260 = vadd.f32 %v247, %v258
      %v261 = vadd.f32 %v248, %v259
      %v262 = vsub.f32 %v37, %v87
      %v263 = vsub.f32 %v38, %v87
      %v264 = vmul.f32 %v262, %v255
      %v265 = vmul.f32 %v263, %v255
      %v266 = vmul.f32 %v264, %v110
      %v267 = vmul.f32 %v265, %v111
      %v268 = vsub.f32 %v115, %v37
      %v269 = vsub.f32 %v115, %v38
      %v270 = vld [vmem:[%s2 + $0x2] sm:$0x1]
      %v271 = vlaneseq
      %v272 = vshrl.u32 %v271, 7
      %v273 = vsub.s32 0, %v272
      %v274 = vrot.slane %v270, %v273
      %v275 = vmul.f32 %v268, %v274
      %v276 = vmul.f32 %v269, %v274
      %v277 = vmul.f32 %v275, %v124
      %v278 = vmul.f32 %v276, %v125
      %v279 = vadd.f32 %v266, %v277
      %v280 = vadd.f32 %v267, %v278
      %v281 = vsub.f32 %v37, %v101
      %v282 = vsub.f32 %v38, %v101
      %v283 = vmul.f32 %v281, %v274
      %v284 = vmul.f32 %v282, %v274
      %v285 = vmul.f32 %v283, %v124
      %v286 = vmul.f32 %v284, %v125
      %v287 = vsub.f32 %v129, %v37
      %v288 = vsub.f32 %v129, %v38
      %v289 = vld [vmem:[%s2 + $0x3] sm:$0x1]
      %v290 = vlaneseq
      %v291 = vshrl.u32 %v290, 7
      %v292 = vsub.s32 0, %v291
      %v293 = vrot.slane %v289, %v292
      %v294 = vmul.f32 %v287, %v293
      %v295 = vmul.f32 %v288, %v293
      %v296 = vmul.f32 %v294, %v138
      %v297 = vmul.f32 %v295, %v139
      %v298 = vadd.f32 %v285, %v296
      %v299 = vadd.f32 %v286, %v297
      %v300 = vsub.f32 %v37, %v115
      %v301 = vsub.f32 %v38, %v115
      %v302 = vmul.f32 %v300, %v293
      %v303 = vmul.f32 %v301, %v293
      %v304 = vmul.f32 %v302, %v138
      %v305 = vmul.f32 %v303, %v139
      %v306 = vsub.f32 %v143, %v37
      %v307 = vsub.f32 %v143, %v38
      %v308 = vld [vmem:[%s2 + $0x4] sm:$0x1]
      %v309 = vlaneseq
      %v310 = vshrl.u32 %v309, 7
      %v311 = vsub.s32 0, %v310
      %v312 = vrot.slane %v308, %v311
      %v313 = vmul.f32 %v306, %v312
      %v314 = vmul.f32 %v307, %v312
      %v315 = vmul.f32 %v313, %v152
      %v316 = vmul.f32 %v314, %v153
      %v317 = vadd.f32 %v304, %v315
      %v318 = vadd.f32 %v305, %v316
      %v319 = vsub.f32 %v37, %v129
      %v320 = vsub.f32 %v38, %v129
      %v321 = vmul.f32 %v319, %v312
      %v322 = vmul.f32 %v320, %v312
      %v323 = vmul.f32 %v321, %v152
      %v324 = vmul.f32 %v322, %v153
      %v325 = vsub.f32 %v157, %v37
      %v326 = vsub.f32 %v157, %v38
      %v327 = vld [vmem:[%s2 + $0x5] sm:$0x1]
      %v328 = vlaneseq
      %v329 = vshrl.u32 %v328, 7
      %v330 = vsub.s32 0, %v329
      %v331 = vrot.slane %v327, %v330
      %v332 = vmul.f32 %v325, %v331
      %v333 = vmul.f32 %v326, %v331
      %v334 = vmul.f32 %v332, %v166
      %v335 = vmul.f32 %v333, %v167
      %v336 = vadd.f32 %v323, %v334
      %v337 = vadd.f32 %v324, %v335
      %v338 = vsub.f32 %v37, %v143
      %v339 = vsub.f32 %v38, %v143
      %v340 = vmul.f32 %v338, %v331
      %v341 = vmul.f32 %v339, %v331
      %v342 = vmul.f32 %v340, %v166
      %v343 = vmul.f32 %v341, %v167
      %v344 = vsub.f32 %v171, %v37
      %v345 = vsub.f32 %v171, %v38
      %v346 = vld [vmem:[%s2 + $0x6] sm:$0x1]
      %v347 = vlaneseq
      %v348 = vshrl.u32 %v347, 7
      %v349 = vsub.s32 0, %v348
      %v350 = vrot.slane %v346, %v349
      %v351 = vmul.f32 %v344, %v350
      %v352 = vmul.f32 %v345, %v350
      %v353 = vmul.f32 %v351, %v180
      %v354 = vmul.f32 %v352, %v181
      %v355 = vadd.f32 %v342, %v353
      %v356 = vadd.f32 %v343, %v354
      %v357 = vsub.f32 %v37, %v157
      %v358 = vsub.f32 %v38, %v157
      %v359 = vmul.f32 %v357, %v350
      %v360 = vmul.f32 %v358, %v350
      %v361 = vmul.f32 %v359, %v180
      %v362 = vmul.f32 %v360, %v181
      %v363 = vsub.f32 %v185, %v37
      %v364 = vsub.f32 %v185, %v38
      %v365 = vld [vmem:[%s2 + $0x7] sm:$0x1]
      %v366 = vlaneseq
      %v367 = vshrl.u32 %v366, 7
      %v368 = vsub.s32 0, %v367
      %v369 = vrot.slane %v365, %v368
      %v370 = vmul.f32 %v363, %v369
      %v371 = vmul.f32 %v364, %v369
      %v372 = vmul.f32 %v370, %v194
      %v373 = vmul.f32 %v371, %v195
      %v374 = vadd.f32 %v361, %v372
      %v375 = vadd.f32 %v362, %v373
      %v376 = vsub.f32 %v37, %v171
      %v377 = vsub.f32 %v38, %v171
      %v378 = vmul.f32 %v376, %v369
      %v379 = vmul.f32 %v377, %v369
      %v380 = vmul.f32 %v378, %v194
      %v381 = vmul.f32 %v379, %v195
      %v382 = vsub.f32 %v199, %v37
      %v383 = vsub.f32 %v199, %v38
      %v384 = vld [vmem:[%s2 + $0x8] sm:$0x1]
      %v385 = vlaneseq
      %v386 = vshrl.u32 %v385, 7
      %v387 = vsub.s32 0, %v386
      %v388 = vrot.slane %v384, %v387
      %v389 = vmul.f32 %v382, %v388
      %v390 = vmul.f32 %v383, %v388
      %v391 = vmul.f32 %v389, %v208
      %v392 = vmul.f32 %v390, %v209
      %v393 = vadd.f32 %v380, %v391
      %v394 = vadd.f32 %v381, %v392
      %v395 = vsub.f32 %v37, %v185
      %v396 = vsub.f32 %v38, %v185
      %v397 = vmul.f32 %v395, %v388
      %v398 = vmul.f32 %v396, %v388
      %v399 = vmul.f32 %v397, %v208
      %v400 = vmul.f32 %v398, %v209
      %v401 = vsub.f32 %v213, %v37
      %v402 = vsub.f32 %v213, %v38
      %v403 = vld [vmem:[%s2 + $0x9] sm:$0x1]
      %v404 = vlaneseq
      %v405 = vshrl.u32 %v404, 7
      %v406 = vsub.s32 0, %v405
      %v407 = vrot.slane %v403, %v406
      %v408 = vmul.f32 %v401, %v407
      %v409 = vmul.f32 %v402, %v407
      %v410 = vmul.f32 %v408, %v222
      %v411 = vmul.f32 %v409, %v223
      %v412 = vadd.f32 %v399, %v410
      %v413 = vadd.f32 %v400, %v411
      %v414 = vsub.f32 %v37, %v199
      %v415 = vsub.f32 %v38, %v199
      %v416 = vmul.f32 %v414, %v407
      %v417 = vmul.f32 %v415, %v407
      %v418 = vmul.f32 %v416, %v222
      %v419 = vmul.f32 %v417, %v223
      %v420 = vsub.f32 %v227, %v37
      %v421 = vsub.f32 %v227, %v38
      %v422 = vld [vmem:[%s2 + $0xa] sm:$0x1]
      %v423 = vlaneseq
      %v424 = vshrl.u32 %v423, 7
      %v425 = vsub.s32 0, %v424
      %v426 = vrot.slane %v422, %v425
      %v427 = vmul.f32 %v420, %v426
      %v428 = vmul.f32 %v421, %v426
      %v429 = vmul.f32 %v427, %v236
      %v430 = vmul.f32 %v428, %v237
      %v431 = vadd.f32 %v418, %v429
      %v432 = vadd.f32 %v419, %v430
      %v433 = vld [vmem:[%s2 + $0xc] sm:$0x1]
      %v434 = vlaneseq
      %v435 = vshrl.u32 %v434, 7
      %v436 = vsub.s32 0, %v435
      %v437 = vrot.slane %v433, %v436
      %v438 = vmul.f32 %v238, %v437
      %v439 = vmul.f32 %v239, %v437
      %v440 = vmul.f32 %v438, %v260
      %v441 = vmul.f32 %v439, %v261
      %v442 = vld [vmem:[%s2 + $0xd] sm:$0x1]
      %v443 = vlaneseq
      %v444 = vshrl.u32 %v443, 7
      %v445 = vsub.s32 0, %v444
      %v446 = vrot.slane %v442, %v445
      %v447 = vmul.f32 %v268, %v446
      %v448 = vmul.f32 %v269, %v446
      %v449 = vmul.f32 %v447, %v279
      %v450 = vmul.f32 %v448, %v280
      %v451 = vadd.f32 %v440, %v449
      %v452 = vadd.f32 %v441, %v450
      %v453 = vmul.f32 %v262, %v446
      %v454 = vmul.f32 %v263, %v446
      %v455 = vmul.f32 %v453, %v279
      %v456 = vmul.f32 %v454, %v280
      %v457 = vld [vmem:[%s2 + $0xe] sm:$0x1]
      %v458 = vlaneseq
      %v459 = vshrl.u32 %v458, 7
      %v460 = vsub.s32 0, %v459
      %v461 = vrot.slane %v457, %v460
      %v462 = vmul.f32 %v287, %v461
      %v463 = vmul.f32 %v288, %v461
      %v464 = vmul.f32 %v462, %v298
      %v465 = vmul.f32 %v463, %v299
      %v466 = vadd.f32 %v455, %v464
      %v467 = vadd.f32 %v456, %v465
      %v468 = vmul.f32 %v281, %v461
      %v469 = vmul.f32 %v282, %v461
      %v470 = vmul.f32 %v468, %v298
      %v471 = vmul.f32 %v469, %v299
      %v472 = vld [vmem:[%s2 + $0xf] sm:$0x1]
      %v473 = vlaneseq
      %v474 = vshrl.u32 %v473, 7
      %v475 = vsub.s32 0, %v474
      %v476 = vrot.slane %v472, %v475
      %v477 = vmul.f32 %v306, %v476
      %v478 = vmul.f32 %v307, %v476
      %v479 = vmul.f32 %v477, %v317
      %v480 = vmul.f32 %v478, %v318
      %v481 = vadd.f32 %v470, %v479
      %v482 = vadd.f32 %v471, %v480
      %v483 = vmul.f32 %v300, %v476
      %v484 = vmul.f32 %v301, %v476
      %v485 = vmul.f32 %v483, %v317
      %v486 = vmul.f32 %v484, %v318
      %v487 = vld [vmem:[%s2 + $0x10] sm:$0x1]
      %v488 = vlaneseq
      %v489 = vshrl.u32 %v488, 7
      %v490 = vsub.s32 0, %v489
      %v491 = vrot.slane %v487, %v490
      %v492 = vmul.f32 %v325, %v491
      %v493 = vmul.f32 %v326, %v491
      %v494 = vmul.f32 %v492, %v336
      %v495 = vmul.f32 %v493, %v337
      %v496 = vadd.f32 %v485, %v494
      %v497 = vadd.f32 %v486, %v495
      %v498 = vmul.f32 %v319, %v491
      %v499 = vmul.f32 %v320, %v491
      %v500 = vmul.f32 %v498, %v336
      %v501 = vmul.f32 %v499, %v337
      %v502 = vld [vmem:[%s2 + $0x11] sm:$0x1]
      %v503 = vlaneseq
      %v504 = vshrl.u32 %v503, 7
      %v505 = vsub.s32 0, %v504
      %v506 = vrot.slane %v502, %v505
      %v507 = vmul.f32 %v344, %v506
      %v508 = vmul.f32 %v345, %v506
      %v509 = vmul.f32 %v507, %v355
      %v510 = vmul.f32 %v508, %v356
      %v511 = vadd.f32 %v500, %v509
      %v512 = vadd.f32 %v501, %v510
      %v513 = vmul.f32 %v338, %v506
      %v514 = vmul.f32 %v339, %v506
      %v515 = vmul.f32 %v513, %v355
      %v516 = vmul.f32 %v514, %v356
      %v517 = vld [vmem:[%s2 + $0x12] sm:$0x1]
      %v518 = vlaneseq
      %v519 = vshrl.u32 %v518, 7
      %v520 = vsub.s32 0, %v519
      %v521 = vrot.slane %v517, %v520
      %v522 = vmul.f32 %v363, %v521
      %v523 = vmul.f32 %v364, %v521
      %v524 = vmul.f32 %v522, %v374
      %v525 = vmul.f32 %v523, %v375
      %v526 = vadd.f32 %v515, %v524
      %v527 = vadd.f32 %v516, %v525
      %v528 = vmul.f32 %v357, %v521
      %v529 = vmul.f32 %v358, %v521
      %v530 = vmul.f32 %v528, %v374
      %v531 = vmul.f32 %v529, %v375
      %v532 = vld [vmem:[%s2 + $0x13] sm:$0x1]
      %v533 = vlaneseq
      %v534 = vshrl.u32 %v533, 7
      %v535 = vsub.s32 0, %v534
      %v536 = vrot.slane %v532, %v535
      %v537 = vmul.f32 %v382, %v536
      %v538 = vmul.f32 %v383, %v536
      %v539 = vmul.f32 %v537, %v393
      %v540 = vmul.f32 %v538, %v394
      %v541 = vadd.f32 %v530, %v539
      %v542 = vadd.f32 %v531, %v540
      %v543 = vmul.f32 %v376, %v536
      %v544 = vmul.f32 %v377, %v536
      %v545 = vmul.f32 %v543, %v393
      %v546 = vmul.f32 %v544, %v394
      %v547 = vld [vmem:[%s2 + $0x14] sm:$0x1]
      %v548 = vlaneseq
      %v549 = vshrl.u32 %v548, 7
      %v550 = vsub.s32 0, %v549
      %v551 = vrot.slane %v547, %v550
      %v552 = vmul.f32 %v401, %v551
      %v553 = vmul.f32 %v402, %v551
      %v554 = vmul.f32 %v552, %v412
      %v555 = vmul.f32 %v553, %v413
      %v556 = vadd.f32 %v545, %v554
      %v557 = vadd.f32 %v546, %v555
      %v558 = vmul.f32 %v395, %v551
      %v559 = vmul.f32 %v396, %v551
      %v560 = vmul.f32 %v558, %v412
      %v561 = vmul.f32 %v559, %v413
      %v562 = vld [vmem:[%s2 + $0x15] sm:$0x1]
      %v563 = vlaneseq
      %v564 = vshrl.u32 %v563, 7
      %v565 = vsub.s32 0, %v564
      %v566 = vrot.slane %v562, %v565
      %v567 = vmul.f32 %v420, %v566
      %v568 = vmul.f32 %v421, %v566
      %v569 = vmul.f32 %v567, %v431
      %v570 = vmul.f32 %v568, %v432
      %v571 = vadd.f32 %v560, %v569
      %v572 = vadd.f32 %v561, %v570
      %v573 = vld [vmem:[%s2 + $0x18] sm:$0x1]
      %v574 = vlaneseq
      %v575 = vshrl.u32 %v574, 7
      %v576 = vsub.s32 0, %v575
      %v577 = vrot.slane %v573, %v576
      %v578 = vmul.f32 %v238, %v577
      %v579 = vmul.f32 %v239, %v577
      %v580 = vmul.f32 %v578, %v451
      %v581 = vmul.f32 %v579, %v452
      %v582 = vld [vmem:[%s2 + $0x19] sm:$0x1]
      %v583 = vlaneseq
      %v584 = vshrl.u32 %v583, 7
      %v585 = vsub.s32 0, %v584
      %v586 = vrot.slane %v582, %v585
      %v587 = vmul.f32 %v287, %v586
      %v588 = vmul.f32 %v288, %v586
      %v589 = vmul.f32 %v587, %v466
      %v590 = vmul.f32 %v588, %v467
      %v591 = vadd.f32 %v580, %v589
      %v592 = vadd.f32 %v581, %v590
      %v593 = vpack.c.bf16 %v592, %v591
      %v595 = vunpack.c.l.b16 %v593
      %v596 = vunpack.c.h.b16 %v593
      %v597 = vpack.c.b16 %v595, %v595
      %v598 = vpack.c.b16 %v596, %v596
      %599 = vrot.lane.b32.xlu0 %v597, 32
      %v600 = vpop.permute.xlu0 %599
      %601 = vrot.lane.b32.xlu0 %v598, 32
      %v602 = vpop.permute.xlu0 %601
      %vm605 = vcmask 519424
      %606 = vst.msk [vmem:[#allocation2] sm:$0xf] %vm605, %v600
      %607 = vst.msk [vmem:[#allocation2 + $0xc] sm:$0xf] %vm605, %v602
      %v608 = vld [vmem:[%s2 + $0x19] sm:$0x1]
      %v609 = vlaneseq
      %v610 = vshrl.u32 %v609, 7
      %v611 = vsub.s32 0, %v610
      %v612 = vrot.slane %v608, %v611
      %v613 = vmul.f32 %v262, %v612
      %v614 = vmul.f32 %v263, %v612
      %v615 = vmul.f32 %v613, %v466
      %v616 = vmul.f32 %v614, %v467
      %v617 = vld [vmem:[%s2 + $0x1a] sm:$0x1]
      %v618 = vlaneseq
      %v619 = vshrl.u32 %v618, 7
      %v620 = vsub.s32 0, %v619
      %v621 = vrot.slane %v617, %v620
      %v622 = vmul.f32 %v306, %v621
      %v623 = vmul.f32 %v307, %v621
      %v624 = vmul.f32 %v622, %v481
      %v625 = vmul.f32 %v623, %v482
      %v626 = vadd.f32 %v615, %v624
      %v627 = vadd.f32 %v616, %v625
      %v628 = vpack.c.bf16 %v627, %v626
      %v630 = vunpack.c.l.b16 %v628
      %v631 = vunpack.c.h.b16 %v628
      %v632 = vpack.c.b16 %v630, %v630
      %v633 = vpack.c.b16 %v631, %v631
      %634 = vrot.lane.b32.xlu0 %v632, 64
      %v635 = vpop.permute.xlu0 %634
      %636 = vrot.lane.b32.xlu0 %v633, 64
      %v637 = vpop.permute.xlu0 %636
      %vm640 = vcmask 781824
      %641 = vst.msk [vmem:[#allocation2] sm:$0xf] %vm640, %v635
      %642 = vst.msk [vmem:[#allocation2 + $0xc] sm:$0xf] %vm640, %v637
      %v643 = vld [vmem:[%s2 + $0x1a] sm:$0x1]
      %v644 = vlaneseq
      %v645 = vshrl.u32 %v644, 7
      %v646 = vsub.s32 0, %v645
      %v647 = vrot.slane %v643, %v646
      %v648 = vmul.f32 %v281, %v647
      %v649 = vmul.f32 %v282, %v647
      %v650 = vmul.f32 %v648, %v481
      %v651 = vmul.f32 %v649, %v482
      %v652 = vld [vmem:[%s2 + $0x1b] sm:$0x1]
      %v653 = vlaneseq
      %v654 = vshrl.u32 %v653, 7
      %v655 = vsub.s32 0, %v654
      %v656 = vrot.slane %v652, %v655
      %v657 = vmul.f32 %v325, %v656
      %v658 = vmul.f32 %v326, %v656
      %v659 = vmul.f32 %v657, %v496
      %v660 = vmul.f32 %v658, %v497
      %v661 = vadd.f32 %v650, %v659
      %v662 = vadd.f32 %v651, %v660
      %v663 = vpack.c.bf16 %v662, %v661
      %v665 = vunpack.c.l.b16 %v663
      %v666 = vunpack.c.h.b16 %v663
      %v667 = vpack.c.b16 %v665, %v665
      %v668 = vpack.c.b16 %v666, %v666
      %669 = vrot.lane.b32.xlu0 %v667, 96
      %v670 = vpop.permute.xlu0 %669
      %671 = vrot.lane.b32.xlu0 %v668, 96
      %v672 = vpop.permute.xlu0 %671
      %vm675 = vcmask 1044224
      %676 = vst.msk [vmem:[#allocation2] sm:$0xf] %vm675, %v670
      %677 = vst.msk [vmem:[#allocation2 + $0xc] sm:$0xf] %vm675, %v672
      %v678 = vld [vmem:[%s2 + $0x1b] sm:$0x1]
      %v679 = vlaneseq
      %v680 = vshrl.u32 %v679, 7
      %v681 = vsub.s32 0, %v680
      %v682 = vrot.slane %v678, %v681
      %v683 = vmul.f32 %v300, %v682
      %v684 = vmul.f32 %v301, %v682
      %v685 = vmul.f32 %v683, %v496
      %v686 = vmul.f32 %v684, %v497
      %v687 = vld [vmem:[%s2 + $0x1c] sm:$0x1]
      %v688 = vlaneseq
      %v689 = vshrl.u32 %v688, 7
      %v690 = vsub.s32 0, %v689
      %v691 = vrot.slane %v687, %v690
      %v692 = vmul.f32 %v344, %v691
      %v693 = vmul.f32 %v345, %v691
      %v694 = vmul.f32 %v692, %v511
      %v695 = vmul.f32 %v693, %v512
      %v696 = vadd.f32 %v685, %v694
      %v697 = vadd.f32 %v686, %v695
      %v698 = vpack.c.bf16 %v697, %v696
      %v700 = vunpack.c.l.b16 %v698
      %v701 = vunpack.c.h.b16 %v698
      %v702 = vpack.c.b16 %v700, %v700
      %v703 = vpack.c.b16 %v701, %v701
      %706 = vst.msk [vmem:[#allocation2 + $0x4] sm:$0xf] %vm59, %v702
      %707 = vst.msk [vmem:[#allocation2 + $0x10] sm:$0xf] %vm59, %v703
      %v708 = vld [vmem:[%s2 + $0x1c] sm:$0x1]
      %v709 = vlaneseq
      %v710 = vshrl.u32 %v709, 7
      %v711 = vsub.s32 0, %v710
      %v712 = vrot.slane %v708, %v711
      %v713 = vmul.f32 %v319, %v712
      %v714 = vmul.f32 %v320, %v712
      %v715 = vmul.f32 %v713, %v511
      %v716 = vmul.f32 %v714, %v512
      %v717 = vld [vmem:[%s2 + $0x1d] sm:$0x1]
      %v718 = vlaneseq
      %v719 = vshrl.u32 %v718, 7
      %v720 = vsub.s32 0, %v719
      %v721 = vrot.slane %v717, %v720
      %v722 = vmul.f32 %v363, %v721
      %v723 = vmul.f32 %v364, %v721
      %v724 = vmul.f32 %v722, %v526
      %v725 = vmul.f32 %v723, %v527
      %v726 = vadd.f32 %v715, %v724
      %v727 = vadd.f32 %v716, %v725
      %v728 = vpack.c.bf16 %v727, %v726
      %v730 = vunpack.c.l.b16 %v728
      %v731 = vunpack.c.h.b16 %v728
      %v732 = vpack.c.b16 %v730, %v730
      %v733 = vpack.c.b16 %v731, %v731
      %734 = vrot.lane.b32.xlu0 %v732, 32
      %v735 = vpop.permute.xlu0 %734
      %736 = vrot.lane.b32.xlu0 %v733, 32
      %v737 = vpop.permute.xlu0 %736
      %740 = vst.msk [vmem:[#allocation2 + $0x4] sm:$0xf] %vm605, %v735
      %741 = vst.msk [vmem:[#allocation2 + $0x10] sm:$0xf] %vm605, %v737
      %v742 = vld [vmem:[%s2 + $0x1d] sm:$0x1]
      %v743 = vlaneseq
      %v744 = vshrl.u32 %v743, 7
      %v745 = vsub.s32 0, %v744
      %v746 = vrot.slane %v742, %v745
      %v747 = vmul.f32 %v338, %v746
      %v748 = vmul.f32 %v339, %v746
      %v749 = vmul.f32 %v747, %v526
      %v750 = vmul.f32 %v748, %v527
      %v751 = vld [vmem:[%s2 + $0x1e] sm:$0x1]
      %v752 = vlaneseq
      %v753 = vshrl.u32 %v752, 7
      %v754 = vsub.s32 0, %v753
      %v755 = vrot.slane %v751, %v754
      %v756 = vmul.f32 %v382, %v755
      %v757 = vmul.f32 %v383, %v755
      %v758 = vmul.f32 %v756, %v541
      %v759 = vmul.f32 %v757, %v542
      %v760 = vadd.f32 %v749, %v758
      %v761 = vadd.f32 %v750, %v759
      %v762 = vpack.c.bf16 %v761, %v760
      %v764 = vunpack.c.l.b16 %v762
      %v765 = vunpack.c.h.b16 %v762
      %v766 = vpack.c.b16 %v764, %v764
      %v767 = vpack.c.b16 %v765, %v765
      %768 = vrot.lane.b32.xlu0 %v766, 64
      %v769 = vpop.permute.xlu0 %768
      %770 = vrot.lane.b32.xlu0 %v767, 64
      %v771 = vpop.permute.xlu0 %770
      %774 = vst.msk [vmem:[#allocation2 + $0x4] sm:$0xf] %vm640, %v769
      %775 = vst.msk [vmem:[#allocation2 + $0x10] sm:$0xf] %vm640, %v771
      %v776 = vld [vmem:[%s2 + $0x1e] sm:$0x1]
      %v777 = vlaneseq
      %v778 = vshrl.u32 %v777, 7
      %v779 = vsub.s32 0, %v778
      %v780 = vrot.slane %v776, %v779
      %v781 = vmul.f32 %v357, %v780
      %v782 = vmul.f32 %v358, %v780
      %v783 = vmul.f32 %v781, %v541
      %v784 = vmul.f32 %v782, %v542
      %v785 = vld [vmem:[%s2 + $0x1f] sm:$0x1]
      %v786 = vlaneseq
      %v787 = vshrl.u32 %v786, 7
      %v788 = vsub.s32 0, %v787
      %v789 = vrot.slane %v785, %v788
      %v790 = vmul.f32 %v401, %v789
      %v791 = vmul.f32 %v402, %v789
      %v792 = vmul.f32 %v790, %v556
      %v793 = vmul.f32 %v791, %v557
      %v794 = vadd.f32 %v783, %v792
      %v795 = vadd.f32 %v784, %v793
      %v796 = vpack.c.bf16 %v795, %v794
      %v798 = vunpack.c.l.b16 %v796
      %v799 = vunpack.c.h.b16 %v796
      %v800 = vpack.c.b16 %v798, %v798
      %v801 = vpack.c.b16 %v799, %v799
      %802 = vrot.lane.b32.xlu0 %v800, 96
      %v803 = vpop.permute.xlu0 %802
      %804 = vrot.lane.b32.xlu0 %v801, 96
      %v805 = vpop.permute.xlu0 %804
      %808 = vst.msk [vmem:[#allocation2 + $0x4] sm:$0xf] %vm675, %v803
      %809 = vst.msk [vmem:[#allocation2 + $0x10] sm:$0xf] %vm675, %v805
      %v810 = vld [vmem:[%s2 + $0x1f] sm:$0x1]
      %v811 = vlaneseq
      %v812 = vshrl.u32 %v811, 7
      %v813 = vsub.s32 0, %v812
      %v814 = vrot.slane %v810, %v813
      %v815 = vmul.f32 %v376, %v814
      %v816 = vmul.f32 %v377, %v814
      %v817 = vmul.f32 %v815, %v556
      %v818 = vmul.f32 %v816, %v557
      %v819 = vld [vmem:[%s2 + $0x20] sm:$0x1]
      %v820 = vlaneseq
      %v821 = vshrl.u32 %v820, 7
      %v822 = vsub.s32 0, %v821
      %v823 = vrot.slane %v819, %v822
      %v824 = vmul.f32 %v420, %v823
      %v825 = vmul.f32 %v421, %v823
      %v826 = vmul.f32 %v824, %v571
      %v827 = vmul.f32 %v825, %v572
      %v828 = vadd.f32 %v817, %v826
      %v829 = vadd.f32 %v818, %v827
      %v830 = vpack.c.bf16 %v829, %v828
      %v832 = vunpack.c.l.b16 %v830
      %v833 = vunpack.c.h.b16 %v830
      %v834 = vpack.c.b16 %v832, %v832
      %v835 = vpack.c.b16 %v833, %v833
      %838 = vst.msk [vmem:[#allocation2 + $0x8] sm:$0xf] %vm59, %v834
      %839 = vst.msk [vmem:[#allocation2 + $0x14] sm:$0xf] %vm59, %v835
    $region25: #{tpu_custom_call.1} parent=1 // pred_fallthru
      _
    %v840 = vld [vmem:[#allocation2] sm:$0xff]
    %v841 = vld [vmem:[#allocation2 + $0x8] sm:$0xf]
    %v842 = vld [vmem:[#allocation2 + $0xc] sm:$0xff]
    %v843 = vld [vmem:[#allocation2 + $0x14] sm:$0xf]
    %v844 = vld [vmem:[#allocation3] sm:$0xf]
    %v845 = vld [vmem:[#allocation3 + $0x4] sm:$0xf]
    %v846 = vld [vmem:[#allocation3 + $0x8] sm:$0xf]
    %v847 = vld [vmem:[#allocation3 + $0xc] sm:$0xf]
    %v848 = vld [vmem:[#allocation3 + $0x10] sm:$0xf]
    %v849 = vld [vmem:[#allocation3 + $0x14] sm:$0xf]
    %v850 = vld [vmem:[#allocation3 + $0x18] sm:$0xf]
    %v851 = vld [vmem:[#allocation3 + $0x1c] sm:$0xf]
    %v852 = vld [vmem:[#allocation3 + $0x20] sm:$0xf]
    %v853 = vld [vmem:[#allocation3 + $0x24] sm:$0xf]
    %v854 = vld [vmem:[#allocation3 + $0x28] sm:$0xf]
    %v855 = vld [vmem:[#allocation3 + $0x2c] sm:$0xf]
    %v856 = vld [vmem:[#allocation3 + $0x30] sm:$0xf]
    %v857 = vld [vmem:[#allocation3 + $0x34] sm:$0xf]
    %v858 = vld [vmem:[#allocation3 + $0x38] sm:$0xf]
    %v859 = vld [vmem:[#allocation3 + $0x3c] sm:$0xf]
    %v860 = vld [vmem:[#allocation3 + $0x40] sm:$0xf]
    %v861 = vld [vmem:[#allocation3 + $0x44] sm:$0xf]
    %v862 = vld [vmem:[#allocation3 + $0x48] sm:$0xf]
    %v863 = vld [vmem:[#allocation3 + $0x4c] sm:$0xf]
    %v864 = vld [vmem:[#allocation3 + $0x50] sm:$0xf]
    %v865 = vld [vmem:[#allocation3 + $0x54] sm:$0xf]
    %v866 = vld [vmem:[#allocation3 + $0x58] sm:$0xf]
    %v867 = vld [vmem:[#allocation3 + $0x5c] sm:$0xf]
    %v868 = vld [vmem:[#allocation3 + $0x60] sm:$0xf]
    %v869 = vld [vmem:[#allocation3 + $0x64] sm:$0xf]
    %v870 = vld [vmem:[#allocation3 + $0x68] sm:$0xf]
    %v871 = vld [vmem:[#allocation3 + $0x6c] sm:$0xf]
    %v872 = vld [vmem:[#allocation3 + $0x70] sm:$0xf]
    %v873 = vld [vmem:[#allocation3 + $0x74] sm:$0xf]
    %v874 = vld [vmem:[#allocation3 + $0x78] sm:$0xf]
    %v875 = vld [vmem:[#allocation3 + $0x7c] sm:$0xf]
    %v876 = vld [vmem:[#allocation3 + $0x80] sm:$0xf]
    %v877 = vld [vmem:[#allocation3 + $0x84] sm:$0xf]
    %v878 = vld [vmem:[#allocation3 + $0x88] sm:$0xf]
    %v879 = vld [vmem:[#allocation3 + $0x8c] sm:$0xf]
    %v884 = vunpack.c.l.b16 %v840
    %v885 = vunpack.c.h.b16 %v840
    %v886 = vunpack.c.l.b16 %v841
    %v887 = vunpack.c.l.b16 %v842
    %v888 = vunpack.c.h.b16 %v842
    %v889 = vunpack.c.l.b16 %v843
    %v890 = vpack.c.b16 %v887, %v884
    %v891 = vpack.c.b16 %v888, %v885
    %v892 = vpack.c.b16 %v889, %v886
    %v931 = vunpack.c.l.b16 %v844
    %v932 = vunpack.c.l.b16 %v845
    %v933 = vunpack.c.l.b16 %v846
    %v934 = vunpack.c.l.b16 %v847
    %v935 = vunpack.c.l.b16 %v848
    %v936 = vunpack.c.l.b16 %v849
    %v937 = vunpack.c.l.b16 %v850
    %v938 = vunpack.c.l.b16 %v851
    %v939 = vunpack.c.l.b16 %v852
    %v940 = vunpack.c.l.b16 %v853
    %v941 = vunpack.c.l.b16 %v854
    %v942 = vunpack.c.l.b16 %v855
    %v943 = vunpack.c.l.b16 %v856
    %v944 = vunpack.c.l.b16 %v857
    %v945 = vunpack.c.l.b16 %v858
    %v946 = vunpack.c.l.b16 %v859
    %v947 = vunpack.c.l.b16 %v860
    %v948 = vunpack.c.l.b16 %v861
    %v949 = vunpack.c.l.b16 %v862
    %v950 = vunpack.c.l.b16 %v863
    %v951 = vunpack.c.l.b16 %v864
    %v952 = vunpack.c.l.b16 %v865
    %v953 = vunpack.c.l.b16 %v866
    %v954 = vunpack.c.l.b16 %v867
    %v955 = vunpack.c.l.b16 %v868
    %v956 = vunpack.c.l.b16 %v869
    %v957 = vunpack.c.l.b16 %v870
    %v958 = vunpack.c.l.b16 %v871
    %v959 = vunpack.c.l.b16 %v872
    %v960 = vunpack.c.l.b16 %v873
    %v961 = vunpack.c.l.b16 %v874
    %v962 = vunpack.c.l.b16 %v875
    %v963 = vunpack.c.l.b16 %v876
    %v964 = vunpack.c.l.b16 %v877
    %v965 = vunpack.c.l.b16 %v878
    %v966 = vunpack.c.l.b16 %v879
    %v967 = vpack.c.b16 %v932, %v931
    %v968 = vpack.c.b16 %v934, %v933
    %v969 = vpack.c.b16 %v936, %v935
    %v970 = vpack.c.b16 %v938, %v937
    %v971 = vpack.c.b16 %v940, %v939
    %v972 = vpack.c.b16 %v942, %v941
    %v973 = vpack.c.b16 %v944, %v943
    %v974 = vpack.c.b16 %v946, %v945
    %v975 = vpack.c.b16 %v948, %v947
    %v976 = vpack.c.b16 %v950, %v949
    %v977 = vpack.c.b16 %v952, %v951
    %v978 = vpack.c.b16 %v954, %v953
    %v979 = vpack.c.b16 %v956, %v955
    %v980 = vpack.c.b16 %v958, %v957
    %v981 = vpack.c.b16 %v960, %v959
    %v982 = vpack.c.b16 %v962, %v961
    %v983 = vpack.c.b16 %v964, %v963
    %v984 = vpack.c.b16 %v966, %v965
    %vm1003 = vcmask 261120
    %v1005 = vsel %vm1003, %v892, 0
    %1007 = vmatprep.subr.bf16.mxu0 0
    %1008 = vmatpush1.bf16.msra.mxu0 %v974
    %1009 = vmatprep.subr.bf16.mxu0 0
    %1010 = vmatpush1.bf16.msra.mxu0 %v973
    %1011 = vmatprep.subr.bf16.mxu0 0
    %1012 = vmatpush1.bf16.msra.mxu0 %v972
    %1013 = vmatprep.subr.bf16.mxu0 0
    %1014 = vmatpush1.bf16.msra.mxu0 %v971
    %1015 = vmatprep.subr.bf16.mxu0 0
    %1016 = vmatpush1.bf16.msra.mxu0 %v970
    %1017 = vmatprep.subr.bf16.mxu0 0
    %1018 = vmatpush1.bf16.msra.mxu0 %v969
    %1019 = vmatprep.subr.bf16.mxu0 0
    %1020 = vmatpush1.bf16.msra.mxu0 %v968
    %1021 = vmatprep.subr.bf16.mxu0 0
    %1022 = vmatpush1.bf16.msra.mxu0 %v967
    %1023 = vmatprep.subr.bf16.mxu0 0
    %1024 = vmatpush2.bf16.msra.mxu0 %v982
    %1025 = vmatprep.subr.bf16.mxu0 0
    %1026 = vmatpush2.bf16.msra.mxu0 %v981
    %1027 = vmatprep.subr.bf16.mxu0 0
    %1028 = vmatpush2.bf16.msra.mxu0 %v980
    %1029 = vmatprep.subr.bf16.mxu0 0
    %1030 = vmatpush2.bf16.msra.mxu0 %v979
    %1031 = vmatprep.subr.bf16.mxu0 0
    %1032 = vmatpush2.bf16.msra.mxu0 %v978
    %1033 = vmatprep.subr.bf16.mxu0 0
    %1034 = vmatpush2.bf16.msra.mxu0 %v977
    %1035 = vmatprep.subr.bf16.mxu0 0
    %1036 = vmatpush2.bf16.msra.mxu0 %v976
    %1037 = vmatprep.subr.bf16.mxu0 0
    %1038 = vmatpush2.bf16.msra.mxu0 %v975
    %1039 = vmatprep.mubr.bf16.mxu0 %v891
    %1040 = vmatmul.mubr.bf16.gmra.mxu0 %v890
    %v1041 = vpop.f32.mrf.mxu0
    %v1042 = vadd.f32 0.0, %v1041
    %v1043 = vpop.f32.mrf.mxu0
    %v1044 = vpop.f32.mrf.mxu0
    %v1045 = vadd.f32 0.0, %v1044
    %v1046 = vpop.f32.mrf.mxu0
    %1047 = vdwg.mxu0
    %1048 = vmatprep.subr.bf16.mxu0 0
    %1049 = vmatpush1.bf16.msra.mxu0 0
    %1050 = vmatprep.subr.bf16.mxu0 0
    %1051 = vmatpush1.bf16.msra.mxu0 0
    %1052 = vmatprep.subr.bf16.mxu0 0
    %1053 = vmatpush1.bf16.msra.mxu0 0
    %1054 = vmatprep.subr.bf16.mxu0 0
    %1055 = vmatpush1.bf16.msra.mxu0 0
    %1056 = vmatprep.subr.bf16.mxu0 0
    %1057 = vmatpush1.bf16.msra.mxu0 0
    %1058 = vmatprep.subr.bf16.mxu0 0
    %1059 = vmatpush1.bf16.msra.mxu0 0
    %1060 = vmatprep.subr.bf16.mxu0 0
    %1061 = vmatpush1.bf16.msra.mxu0 %v984
    %1062 = vmatprep.subr.bf16.mxu0 0
    %1063 = vmatpush1.bf16.msra.mxu0 %v983
    %1064 = vmatprep.subr.bf16.mxu0 0
    %1065 = vmatpush2.bf16.msra.mxu0 0
    %1066 = vmatprep.subr.bf16.mxu0 0
    %1067 = vmatpush2.bf16.msra.mxu0 0
    %1068 = vmatprep.subr.bf16.mxu0 0
    %1069 = vmatpush2.bf16.msra.mxu0 0
    %1070 = vmatprep.subr.bf16.mxu0 0
    %1071 = vmatpush2.bf16.msra.mxu0 0
    %1072 = vmatprep.subr.bf16.mxu0 0
    %1073 = vmatpush2.bf16.msra.mxu0 0
    %1074 = vmatprep.subr.bf16.mxu0 0
    %1075 = vmatpush2.bf16.msra.mxu0 0
    %1076 = vmatprep.subr.bf16.mxu0 0
    %1077 = vmatpush2.bf16.msra.mxu0 0
    %1078 = vmatprep.subr.bf16.mxu0 0
    %1079 = vmatpush2.bf16.msra.mxu0 0
    %1080 = vmatprep.mubr.bf16.mxu0 0
    %1081 = vmatmul.mubr.bf16.gmra.mxu0 %v1005
    %v1082 = vpop.f32.mrf.mxu0
    %v1083 = vadd.f32 %v1042, %v1082
    %v1084 = vpop.f32.mrf.mxu0
    %v1085 = vpop.f32.mrf.mxu0
    %v1086 = vadd.f32 %v1045, %v1085
    %v1087 = vpop.f32.mrf.mxu0
    %1088 = vdwg.mxu0
    %1089 = vst [vmem:[#allocation6] sm:$0xff] %v1083
    %1090 = vst [vmem:[#allocation6 + $0x8] sm:$0xff] %v1086
    // Predicated region
    $region26: #{tpu_custom_call.1} parent=1 // pred_check
      _
    $region27: #{tpu_custom_call.1} parent=1 // pred_check_branch
      %1092 = sbr.rel (0) target = $region29
    $region28: #{tpu_custom_call.1} parent=1 // pred_region
      %s1094 = ssub.s32 256, 256
      %1095 = vsyncadd [#allocation5], %s1094
      %s1096 = sshll.u32 [#allocation6], 4
      %s1097 = int_to_ptr.vmem [resolvable:$true] %s1096
      %1102 = dma.vmem_to_hbm [thread:$0]  %s1097, 256, %s4, [#allocation5], 128, 128, 8
    $region29: #{tpu_custom_call.1} parent=1 // pred_fallthru
      _
    // Predicated region
    $region30: #{tpu_custom_call.1} parent=1 // pred_check
      _
    $region31: #{tpu_custom_call.1} parent=1 // pred_check_branch
      %1104 = sbr.rel (0) target = $region33
    $region32: #{tpu_custom_call.1} parent=1 // pred_region
      %1105 = dma.done [#allocation5], 256
    $region33: #{tpu_custom_call.1} parent=1 // pred_fallthru
      _
    %1106 = vsyncpa [#allocation4], 1
    %1107 = vsyncpa [#allocation5], 1

</llo_original>
